<compile_context>
chip_gen: v5e
topology: v5e:2x2
jax: 0.10.0
libtpu: 0.0.40
codegen_flags: <defaults>
</compile_context>

<pallas_src>
import math
from functools import partial

import jax
import jax.numpy as jnp
from jax.experimental import pallas as pl
from jax.experimental.pallas import tpu as pltpu


# Per-chunk compute width in lanes.  Keep at 512: the layer-2 accumulator is
# (32, CHUNK) and h1 is (16, CHUNK); wider chunks push the live set past half
# the 64-vreg file and force spills.  Step-overhead amortization comes from
# the *outer* BlockSpec tile, not a wider chunk.
_CHUNK = 512


def _round_up(n, m):
    return ((n + m - 1) // m) * m


def _affine_vpu(w_ref, b_ref, h):
    """y = W @ h + b via an unrolled VPU broadcast-FMA chain (no MXU round trip).

    w_ref: (out, in), b_ref: (out, 1), h: (in, T)  ->  (out, T)
    The contraction dims are tiny (2/16/32), so a lane-wise FMA chain beats a
    ~1%-utilized vmatmul.  Accumulation stays f32; the bias broadcast happens
    once (accumulator init), outside the k-loop.
    """
    w = w_ref[...]
    in_dim = w.shape[1]
    acc = b_ref[...] + w[:, 0:1] * h[0:1, :]
    for k in range(1, in_dim):
        acc = acc + w[:, k:k + 1] * h[k:k + 1, :]
    return acc
    # TODO(synk): audit the lane/sublane broadcast lowering with a bundle dump;
    # if it shows XLU/VALU-heavy splats, switch the h-row broadcasts to
    # stride-0 ref loads from a VMEM-staged h (idle vld slots), and/or move
    # layer 2 to the MXU with precision=HIGHEST.


def _make_kernel(num_chunks, chunk):
    def kernel(x_ref, w1_ref, b1_ref, w2_ref, b2_ref, w3_ref, b3_ref, o_ref):
        # Inner chunk loop: amortize per-grid-step pipeline overhead while the
        # live working set stays at one 512-lane chunk.  Offsets are static
        # (multiples of 512), so addressing is aligned and free.
        for c in range(num_chunks):
            lo = c * chunk
            h = x_ref[:, lo:lo + chunk]                                  # (2,  C)
            h = jnp.maximum(_affine_vpu(w1_ref, b1_ref, h), 0.0)         # (16, C)
            h = jnp.maximum(_affine_vpu(w2_ref, b2_ref, h), 0.0)         # (32, C)
            o_ref[:, lo:lo + chunk] = _affine_vpu(w3_ref, b3_ref, h).astype(o_ref.dtype)
    return kernel


@partial(jax.jit, static_argnames=("tile_b",))
def generator_forward(x, params, *, tile_b=4096):
    """Run the fused Generator MLP as a single batch-tiled Pallas kernel.

    x: (B, 2) float32
    params: dict with w1(16,2), b1(16,1), w2(32,16), b2(32,1), w3(2,32), b3(2,1)
    returns: (B, 2) float32
    """
    B = x.shape[0]

    # Batch tile: a multiple of the 512-lane chunk, large to amortize per-step
    # overhead, but capped so the grid keeps >= 2 steps when B allows (v7x has
    # 2 TensorCores sharing the "parallel" grid axis).
    tile_b = max(_CHUNK, _round_up(tile_b, _CHUNK))
    tile_b = min(tile_b, max(_CHUNK, _round_up(pl.cdiv(B, 2), _CHUNK)))
    grid = (pl.cdiv(B, tile_b),)
    num_chunks = tile_b // _CHUNK

    # Lane-dense transposed layout: (2, B) with batch on lanes.  No zero-pad;
    # Pallas masks the ragged last block's HBM writeback and every batch
    # column is independent, so garbage tail lanes are benign.
    # TODO(synk): when embedded in a larger graph, make (2, B) the canonical
    # activation layout so this transpose (and the one on exit) folds into the
    # producer/consumer instead of standalone XLA ops.
    x_t = x.T.astype(jnp.float32)

    w1, b1 = params["w1"], params["b1"]
    w2, b2 = params["w2"], params["b2"]
    w3, b3 = params["w3"], params["b3"]

    def batch_spec():
        return pl.BlockSpec((2, tile_b), lambda i: (0, i))

    def resident_spec(shape):
        # Full-array block, constant index_map -> stays resident in VMEM.
        return pl.BlockSpec(shape, lambda i: (0, 0))

    out_t = pl.pallas_call(
        _make_kernel(num_chunks, _CHUNK),
        out_shape=jax.ShapeDtypeStruct((2, B), jnp.float32),
        grid=grid,
        in_specs=[
            batch_spec(),                 # x  (2, tile_b)
            resident_spec(w1.shape),      # w1 (16, 2)
            resident_spec(b1.shape),      # b1 (16, 1)
            resident_spec(w2.shape),      # w2 (32, 16)
            resident_spec(b2.shape),      # b2 (32, 1)
            resident_spec(w3.shape),      # w3 (2, 32)
            resident_spec(b3.shape),      # b3 (2, 1)
        ],
        out_specs=batch_spec(),
        compiler_params=pltpu.CompilerParams(
            dimension_semantics=("parallel",),  # shard batch tiles across TCs (v7x)
        ),
    )(x_t, w1, b1, w2, b2, w3, b3)

    return out_t.T


def init_params(key):
    """Deterministic init mimicking PyTorch's default Linear init:
    U(-1/sqrt(fan_in), 1/sqrt(fan_in)).  Weights stored (out, in),
    biases stored as (out, 1) columns for the transposed kernel layout."""

    def linear(key, fan_in, fan_out):
        kw, kb = jax.random.split(key)
        bound = 1.0 / math.sqrt(fan_in)
        w = jax.random.uniform(kw, (fan_out, fan_in), jnp.float32, -bound, bound)
        b = jax.random.uniform(kb, (fan_out, 1), jnp.float32, -bound, bound)
        return w, b

    k1, k2, k3 = jax.random.split(key, 3)
    w1, b1 = linear(k1, 2, 16)
    w2, b2 = linear(k2, 16, 32)
    w3, b3 = linear(k3, 32, 2)
    return {"w1": w1, "b1": b1, "w2": w2, "b2": b2, "w3": w3, "b3": b3}


def reference_forward(x, p):
    hp = jax.lax.Precision.HIGHEST
    h1 = jnp.maximum(jnp.dot(x, p["w1"].T, precision=hp) + p["b1"][:, 0], 0.0)
    h2 = jnp.maximum(jnp.dot(h1, p["w2"].T, precision=hp) + p["b2"][:, 0], 0.0)
    return jnp.dot(h2, p["w3"].T, precision=hp) + p["b3"][:, 0]


if __name__ == "__main__":
    key = jax.random.PRNGKey(0)
    kp, kx1, kx2, kx3 = jax.random.split(key, 4)
    params = init_params(kp)

    # Small batch matching the original module usage (latent points in R^2):
    # single partial block (8 valid of 512 lanes).
    x = jax.random.normal(kx1, (8, 2), jnp.float32)
    out = jax.block_until_ready(generator_forward(x, params))
    ref = reference_forward(x, params)
    assert out.shape == (8, 2), out.shape
    assert jnp.allclose(out, ref, atol=1e-5, rtol=1e-5), "mismatch vs reference (B=8)"

    # Larger ragged batch: tile_b clamps to 1024 -> 2 grid steps, 2 chunks per
    # step, partial last block (176 of 1024 valid lanes, no host-side padding).
    x2 = jax.random.normal(kx2, (1200, 2), jnp.float32)
    out2 = jax.block_until_ready(generator_forward(x2, params))
    ref2 = reference_forward(x2, params)
    assert out2.shape == (1200, 2), out2.shape
    assert jnp.allclose(out2, ref2, atol=1e-5, rtol=1e-5), "mismatch vs reference (B=1200)"

    # Odd small batch exercising a single ragged block.
    x3 = jax.random.normal(kx3, (300, 2), jnp.float32)
    out3 = jax.block_until_ready(generator_forward(x3, params))
    ref3 = reference_forward(x3, params)
    assert out3.shape == (300, 2), out3.shape
    assert jnp.allclose(out3, ref3, atol=1e-5, rtol=1e-5), "mismatch vs reference (B=300)"

    print("KERNEL_OK")
</pallas_src>

<mosaic_0001>
module attributes {stable_mosaic.version = 11 : i64} {
  func.func @kernel(%arg0: i32, %arg1: memref<2x512xf32, #tpu.memory_space<vmem>>, %arg2: memref<16x2xf32, #tpu.memory_space<vmem>>, %arg3: memref<16x1xf32, #tpu.memory_space<vmem>>, %arg4: memref<32x16xf32, #tpu.memory_space<vmem>>, %arg5: memref<32x1xf32, #tpu.memory_space<vmem>>, %arg6: memref<2x32xf32, #tpu.memory_space<vmem>>, %arg7: memref<2x1xf32, #tpu.memory_space<vmem>>, %arg8: memref<2x512xf32, #tpu.memory_space<vmem>>) attributes {dimension_semantics = [#tpu.dimension_semantics<parallel>], iteration_bounds = array<i64: 1>, scalar_prefetch = 0 : i64, scratch_operands = 0 : i64, tpu.core_type = #tpu.core_type<tc>, window_params = [{transform_indices = @transform_0, window_bounds = array<i64: 2, 512>}, {pipeline_mode = #tpu.pipeline_mode<synchronous>, transform_indices = @transform_1, window_bounds = array<i64: 16, 2>}, {pipeline_mode = #tpu.pipeline_mode<synchronous>, transform_indices = @transform_2, window_bounds = array<i64: 16, 1>}, {pipeline_mode = #tpu.pipeline_mode<synchronous>, transform_indices = @transform_3, window_bounds = array<i64: 32, 16>}, {pipeline_mode = #tpu.pipeline_mode<synchronous>, transform_indices = @transform_4, window_bounds = array<i64: 32, 1>}, {pipeline_mode = #tpu.pipeline_mode<synchronous>, transform_indices = @transform_5, window_bounds = array<i64: 2, 32>}, {pipeline_mode = #tpu.pipeline_mode<synchronous>, transform_indices = @transform_6, window_bounds = array<i64: 2, 1>}, {transform_indices = @transform_7, window_bounds = array<i64: 2, 512>}]} {
    %c0 = arith.constant 0 : index
    %c0_0 = arith.constant 0 : index
    %0 = vector.load %arg1[%c0, %c0_0] : memref<2x512xf32, #tpu.memory_space<vmem>>, vector<2x512xf32>
    %c0_1 = arith.constant 0 : index
    %c0_2 = arith.constant 0 : index
    %1 = vector.load %arg2[%c0_1, %c0_2] : memref<16x2xf32, #tpu.memory_space<vmem>>, vector<16x2xf32>
    %c0_3 = arith.constant 0 : index
    %c0_4 = arith.constant 0 : index
    %2 = vector.load %arg3[%c0_3, %c0_4] : memref<16x1xf32, #tpu.memory_space<vmem>>, vector<16x1xf32>
    %3 = vector.extract_strided_slice %1 {offsets = [0, 0], sizes = [16, 1], strides = [1, 1]} : vector<16x2xf32> to vector<16x1xf32>
    %4 = vector.extract_strided_slice %0 {offsets = [0, 0], sizes = [1, 512], strides = [1, 1]} : vector<2x512xf32> to vector<1x512xf32>
    %5 = vector.broadcast %3 : vector<16x1xf32> to vector<16x512xf32>
    %6 = vector.broadcast %4 : vector<1x512xf32> to vector<16x512xf32>
    %7 = arith.mulf %5, %6 : vector<16x512xf32>
    %8 = vector.broadcast %2 : vector<16x1xf32> to vector<16x512xf32>
    %9 = arith.addf %8, %7 : vector<16x512xf32>
    %10 = vector.extract_strided_slice %1 {offsets = [0, 1], sizes = [16, 1], strides = [1, 1]} : vector<16x2xf32> to vector<16x1xf32>
    %11 = vector.extract_strided_slice %0 {offsets = [1, 0], sizes = [1, 512], strides = [1, 1]} : vector<2x512xf32> to vector<1x512xf32>
    %12 = vector.broadcast %10 : vector<16x1xf32> to vector<16x512xf32>
    %13 = vector.broadcast %11 : vector<1x512xf32> to vector<16x512xf32>
    %14 = arith.mulf %12, %13 : vector<16x512xf32>
    %15 = arith.addf %9, %14 : vector<16x512xf32>
    %cst = arith.constant 0.000000e+00 : f32
    %16 = vector.broadcast %cst : f32 to vector<16x512xf32>
    %17 = arith.maximumf %15, %16 : vector<16x512xf32>
    %c0_5 = arith.constant 0 : index
    %c0_6 = arith.constant 0 : index
    %18 = vector.load %arg4[%c0_5, %c0_6] : memref<32x16xf32, #tpu.memory_space<vmem>>, vector<32x16xf32>
    %c0_7 = arith.constant 0 : index
    %c0_8 = arith.constant 0 : index
    %19 = vector.load %arg5[%c0_7, %c0_8] : memref<32x1xf32, #tpu.memory_space<vmem>>, vector<32x1xf32>
    %20 = vector.extract_strided_slice %18 {offsets = [0, 0], sizes = [32, 1], strides = [1, 1]} : vector<32x16xf32> to vector<32x1xf32>
    %21 = vector.extract_strided_slice %17 {offsets = [0, 0], sizes = [1, 512], strides = [1, 1]} : vector<16x512xf32> to vector<1x512xf32>
    %22 = vector.broadcast %20 : vector<32x1xf32> to vector<32x512xf32>
    %23 = vector.broadcast %21 : vector<1x512xf32> to vector<32x512xf32>
    %24 = arith.mulf %22, %23 : vector<32x512xf32>
    %25 = vector.broadcast %19 : vector<32x1xf32> to vector<32x512xf32>
    %26 = arith.addf %25, %24 : vector<32x512xf32>
    %27 = vector.extract_strided_slice %18 {offsets = [0, 1], sizes = [32, 1], strides = [1, 1]} : vector<32x16xf32> to vector<32x1xf32>
    %28 = vector.extract_strided_slice %17 {offsets = [1, 0], sizes = [1, 512], strides = [1, 1]} : vector<16x512xf32> to vector<1x512xf32>
    %29 = vector.broadcast %27 : vector<32x1xf32> to vector<32x512xf32>
    %30 = vector.broadcast %28 : vector<1x512xf32> to vector<32x512xf32>
    %31 = arith.mulf %29, %30 : vector<32x512xf32>
    %32 = arith.addf %26, %31 : vector<32x512xf32>
    %33 = vector.extract_strided_slice %18 {offsets = [0, 2], sizes = [32, 1], strides = [1, 1]} : vector<32x16xf32> to vector<32x1xf32>
    %34 = vector.extract_strided_slice %17 {offsets = [2, 0], sizes = [1, 512], strides = [1, 1]} : vector<16x512xf32> to vector<1x512xf32>
    %35 = vector.broadcast %33 : vector<32x1xf32> to vector<32x512xf32>
    %36 = vector.broadcast %34 : vector<1x512xf32> to vector<32x512xf32>
    %37 = arith.mulf %35, %36 : vector<32x512xf32>
    %38 = arith.addf %32, %37 : vector<32x512xf32>
    %39 = vector.extract_strided_slice %18 {offsets = [0, 3], sizes = [32, 1], strides = [1, 1]} : vector<32x16xf32> to vector<32x1xf32>
    %40 = vector.extract_strided_slice %17 {offsets = [3, 0], sizes = [1, 512], strides = [1, 1]} : vector<16x512xf32> to vector<1x512xf32>
    %41 = vector.broadcast %39 : vector<32x1xf32> to vector<32x512xf32>
    %42 = vector.broadcast %40 : vector<1x512xf32> to vector<32x512xf32>
    %43 = arith.mulf %41, %42 : vector<32x512xf32>
    %44 = arith.addf %38, %43 : vector<32x512xf32>
    %45 = vector.extract_strided_slice %18 {offsets = [0, 4], sizes = [32, 1], strides = [1, 1]} : vector<32x16xf32> to vector<32x1xf32>
    %46 = vector.extract_strided_slice %17 {offsets = [4, 0], sizes = [1, 512], strides = [1, 1]} : vector<16x512xf32> to vector<1x512xf32>
    %47 = vector.broadcast %45 : vector<32x1xf32> to vector<32x512xf32>
    %48 = vector.broadcast %46 : vector<1x512xf32> to vector<32x512xf32>
    %49 = arith.mulf %47, %48 : vector<32x512xf32>
    %50 = arith.addf %44, %49 : vector<32x512xf32>
    %51 = vector.extract_strided_slice %18 {offsets = [0, 5], sizes = [32, 1], strides = [1, 1]} : vector<32x16xf32> to vector<32x1xf32>
    %52 = vector.extract_strided_slice %17 {offsets = [5, 0], sizes = [1, 512], strides = [1, 1]} : vector<16x512xf32> to vector<1x512xf32>
    %53 = vector.broadcast %51 : vector<32x1xf32> to vector<32x512xf32>
    %54 = vector.broadcast %52 : vector<1x512xf32> to vector<32x512xf32>
    %55 = arith.mulf %53, %54 : vector<32x512xf32>
    %56 = arith.addf %50, %55 : vector<32x512xf32>
    %57 = vector.extract_strided_slice %18 {offsets = [0, 6], sizes = [32, 1], strides = [1, 1]} : vector<32x16xf32> to vector<32x1xf32>
    %58 = vector.extract_strided_slice %17 {offsets = [6, 0], sizes = [1, 512], strides = [1, 1]} : vector<16x512xf32> to vector<1x512xf32>
    %59 = vector.broadcast %57 : vector<32x1xf32> to vector<32x512xf32>
    %60 = vector.broadcast %58 : vector<1x512xf32> to vector<32x512xf32>
    %61 = arith.mulf %59, %60 : vector<32x512xf32>
    %62 = arith.addf %56, %61 : vector<32x512xf32>
    %63 = vector.extract_strided_slice %18 {offsets = [0, 7], sizes = [32, 1], strides = [1, 1]} : vector<32x16xf32> to vector<32x1xf32>
    %64 = vector.extract_strided_slice %17 {offsets = [7, 0], sizes = [1, 512], strides = [1, 1]} : vector<16x512xf32> to vector<1x512xf32>
    %65 = vector.broadcast %63 : vector<32x1xf32> to vector<32x512xf32>
    %66 = vector.broadcast %64 : vector<1x512xf32> to vector<32x512xf32>
    %67 = arith.mulf %65, %66 : vector<32x512xf32>
    %68 = arith.addf %62, %67 : vector<32x512xf32>
    %69 = vector.extract_strided_slice %18 {offsets = [0, 8], sizes = [32, 1], strides = [1, 1]} : vector<32x16xf32> to vector<32x1xf32>
    %70 = vector.extract_strided_slice %17 {offsets = [8, 0], sizes = [1, 512], strides = [1, 1]} : vector<16x512xf32> to vector<1x512xf32>
    %71 = vector.broadcast %69 : vector<32x1xf32> to vector<32x512xf32>
    %72 = vector.broadcast %70 : vector<1x512xf32> to vector<32x512xf32>
    %73 = arith.mulf %71, %72 : vector<32x512xf32>
    %74 = arith.addf %68, %73 : vector<32x512xf32>
    %75 = vector.extract_strided_slice %18 {offsets = [0, 9], sizes = [32, 1], strides = [1, 1]} : vector<32x16xf32> to vector<32x1xf32>
    %76 = vector.extract_strided_slice %17 {offsets = [9, 0], sizes = [1, 512], strides = [1, 1]} : vector<16x512xf32> to vector<1x512xf32>
    %77 = vector.broadcast %75 : vector<32x1xf32> to vector<32x512xf32>
    %78 = vector.broadcast %76 : vector<1x512xf32> to vector<32x512xf32>
    %79 = arith.mulf %77, %78 : vector<32x512xf32>
    %80 = arith.addf %74, %79 : vector<32x512xf32>
    %81 = vector.extract_strided_slice %18 {offsets = [0, 10], sizes = [32, 1], strides = [1, 1]} : vector<32x16xf32> to vector<32x1xf32>
    %82 = vector.extract_strided_slice %17 {offsets = [10, 0], sizes = [1, 512], strides = [1, 1]} : vector<16x512xf32> to vector<1x512xf32>
    %83 = vector.broadcast %81 : vector<32x1xf32> to vector<32x512xf32>
    %84 = vector.broadcast %82 : vector<1x512xf32> to vector<32x512xf32>
    %85 = arith.mulf %83, %84 : vector<32x512xf32>
    %86 = arith.addf %80, %85 : vector<32x512xf32>
    %87 = vector.extract_strided_slice %18 {offsets = [0, 11], sizes = [32, 1], strides = [1, 1]} : vector<32x16xf32> to vector<32x1xf32>
    %88 = vector.extract_strided_slice %17 {offsets = [11, 0], sizes = [1, 512], strides = [1, 1]} : vector<16x512xf32> to vector<1x512xf32>
    %89 = vector.broadcast %87 : vector<32x1xf32> to vector<32x512xf32>
    %90 = vector.broadcast %88 : vector<1x512xf32> to vector<32x512xf32>
    %91 = arith.mulf %89, %90 : vector<32x512xf32>
    %92 = arith.addf %86, %91 : vector<32x512xf32>
    %93 = vector.extract_strided_slice %18 {offsets = [0, 12], sizes = [32, 1], strides = [1, 1]} : vector<32x16xf32> to vector<32x1xf32>
    %94 = vector.extract_strided_slice %17 {offsets = [12, 0], sizes = [1, 512], strides = [1, 1]} : vector<16x512xf32> to vector<1x512xf32>
    %95 = vector.broadcast %93 : vector<32x1xf32> to vector<32x512xf32>
    %96 = vector.broadcast %94 : vector<1x512xf32> to vector<32x512xf32>
    %97 = arith.mulf %95, %96 : vector<32x512xf32>
    %98 = arith.addf %92, %97 : vector<32x512xf32>
    %99 = vector.extract_strided_slice %18 {offsets = [0, 13], sizes = [32, 1], strides = [1, 1]} : vector<32x16xf32> to vector<32x1xf32>
    %100 = vector.extract_strided_slice %17 {offsets = [13, 0], sizes = [1, 512], strides = [1, 1]} : vector<16x512xf32> to vector<1x512xf32>
    %101 = vector.broadcast %99 : vector<32x1xf32> to vector<32x512xf32>
    %102 = vector.broadcast %100 : vector<1x512xf32> to vector<32x512xf32>
    %103 = arith.mulf %101, %102 : vector<32x512xf32>
    %104 = arith.addf %98, %103 : vector<32x512xf32>
    %105 = vector.extract_strided_slice %18 {offsets = [0, 14], sizes = [32, 1], strides = [1, 1]} : vector<32x16xf32> to vector<32x1xf32>
    %106 = vector.extract_strided_slice %17 {offsets = [14, 0], sizes = [1, 512], strides = [1, 1]} : vector<16x512xf32> to vector<1x512xf32>
    %107 = vector.broadcast %105 : vector<32x1xf32> to vector<32x512xf32>
    %108 = vector.broadcast %106 : vector<1x512xf32> to vector<32x512xf32>
    %109 = arith.mulf %107, %108 : vector<32x512xf32>
    %110 = arith.addf %104, %109 : vector<32x512xf32>
    %111 = vector.extract_strided_slice %18 {offsets = [0, 15], sizes = [32, 1], strides = [1, 1]} : vector<32x16xf32> to vector<32x1xf32>
    %112 = vector.extract_strided_slice %17 {offsets = [15, 0], sizes = [1, 512], strides = [1, 1]} : vector<16x512xf32> to vector<1x512xf32>
    %113 = vector.broadcast %111 : vector<32x1xf32> to vector<32x512xf32>
    %114 = vector.broadcast %112 : vector<1x512xf32> to vector<32x512xf32>
    %115 = arith.mulf %113, %114 : vector<32x512xf32>
    %116 = arith.addf %110, %115 : vector<32x512xf32>
    %cst_9 = arith.constant 0.000000e+00 : f32
    %117 = vector.broadcast %cst_9 : f32 to vector<32x512xf32>
    %118 = arith.maximumf %116, %117 : vector<32x512xf32>
    %c0_10 = arith.constant 0 : index
    %c0_11 = arith.constant 0 : index
    %119 = vector.load %arg6[%c0_10, %c0_11] : memref<2x32xf32, #tpu.memory_space<vmem>>, vector<2x32xf32>
    %c0_12 = arith.constant 0 : index
    %c0_13 = arith.constant 0 : index
    %120 = vector.load %arg7[%c0_12, %c0_13] : memref<2x1xf32, #tpu.memory_space<vmem>>, vector<2x1xf32>
    %121 = vector.extract_strided_slice %119 {offsets = [0, 0], sizes = [2, 1], strides = [1, 1]} : vector<2x32xf32> to vector<2x1xf32>
    %122 = vector.extract_strided_slice %118 {offsets = [0, 0], sizes = [1, 512], strides = [1, 1]} : vector<32x512xf32> to vector<1x512xf32>
    %123 = vector.broadcast %121 : vector<2x1xf32> to vector<2x512xf32>
    %124 = vector.broadcast %122 : vector<1x512xf32> to vector<2x512xf32>
    %125 = arith.mulf %123, %124 : vector<2x512xf32>
    %126 = vector.broadcast %120 : vector<2x1xf32> to vector<2x512xf32>
    %127 = arith.addf %126, %125 : vector<2x512xf32>
    %128 = vector.extract_strided_slice %119 {offsets = [0, 1], sizes = [2, 1], strides = [1, 1]} : vector<2x32xf32> to vector<2x1xf32>
    %129 = vector.extract_strided_slice %118 {offsets = [1, 0], sizes = [1, 512], strides = [1, 1]} : vector<32x512xf32> to vector<1x512xf32>
    %130 = vector.broadcast %128 : vector<2x1xf32> to vector<2x512xf32>
    %131 = vector.broadcast %129 : vector<1x512xf32> to vector<2x512xf32>
    %132 = arith.mulf %130, %131 : vector<2x512xf32>
    %133 = arith.addf %127, %132 : vector<2x512xf32>
    %134 = vector.extract_strided_slice %119 {offsets = [0, 2], sizes = [2, 1], strides = [1, 1]} : vector<2x32xf32> to vector<2x1xf32>
    %135 = vector.extract_strided_slice %118 {offsets = [2, 0], sizes = [1, 512], strides = [1, 1]} : vector<32x512xf32> to vector<1x512xf32>
    %136 = vector.broadcast %134 : vector<2x1xf32> to vector<2x512xf32>
    %137 = vector.broadcast %135 : vector<1x512xf32> to vector<2x512xf32>
    %138 = arith.mulf %136, %137 : vector<2x512xf32>
    %139 = arith.addf %133, %138 : vector<2x512xf32>
    %140 = vector.extract_strided_slice %119 {offsets = [0, 3], sizes = [2, 1], strides = [1, 1]} : vector<2x32xf32> to vector<2x1xf32>
    %141 = vector.extract_strided_slice %118 {offsets = [3, 0], sizes = [1, 512], strides = [1, 1]} : vector<32x512xf32> to vector<1x512xf32>
    %142 = vector.broadcast %140 : vector<2x1xf32> to vector<2x512xf32>
    %143 = vector.broadcast %141 : vector<1x512xf32> to vector<2x512xf32>
    %144 = arith.mulf %142, %143 : vector<2x512xf32>
    %145 = arith.addf %139, %144 : vector<2x512xf32>
    %146 = vector.extract_strided_slice %119 {offsets = [0, 4], sizes = [2, 1], strides = [1, 1]} : vector<2x32xf32> to vector<2x1xf32>
    %147 = vector.extract_strided_slice %118 {offsets = [4, 0], sizes = [1, 512], strides = [1, 1]} : vector<32x512xf32> to vector<1x512xf32>
    %148 = vector.broadcast %146 : vector<2x1xf32> to vector<2x512xf32>
    %149 = vector.broadcast %147 : vector<1x512xf32> to vector<2x512xf32>
    %150 = arith.mulf %148, %149 : vector<2x512xf32>
    %151 = arith.addf %145, %150 : vector<2x512xf32>
    %152 = vector.extract_strided_slice %119 {offsets = [0, 5], sizes = [2, 1], strides = [1, 1]} : vector<2x32xf32> to vector<2x1xf32>
    %153 = vector.extract_strided_slice %118 {offsets = [5, 0], sizes = [1, 512], strides = [1, 1]} : vector<32x512xf32> to vector<1x512xf32>
    %154 = vector.broadcast %152 : vector<2x1xf32> to vector<2x512xf32>
    %155 = vector.broadcast %153 : vector<1x512xf32> to vector<2x512xf32>
    %156 = arith.mulf %154, %155 : vector<2x512xf32>
    %157 = arith.addf %151, %156 : vector<2x512xf32>
    %158 = vector.extract_strided_slice %119 {offsets = [0, 6], sizes = [2, 1], strides = [1, 1]} : vector<2x32xf32> to vector<2x1xf32>
    %159 = vector.extract_strided_slice %118 {offsets = [6, 0], sizes = [1, 512], strides = [1, 1]} : vector<32x512xf32> to vector<1x512xf32>
    %160 = vector.broadcast %158 : vector<2x1xf32> to vector<2x512xf32>
    %161 = vector.broadcast %159 : vector<1x512xf32> to vector<2x512xf32>
    %162 = arith.mulf %160, %161 : vector<2x512xf32>
    %163 = arith.addf %157, %162 : vector<2x512xf32>
    %164 = vector.extract_strided_slice %119 {offsets = [0, 7], sizes = [2, 1], strides = [1, 1]} : vector<2x32xf32> to vector<2x1xf32>
    %165 = vector.extract_strided_slice %118 {offsets = [7, 0], sizes = [1, 512], strides = [1, 1]} : vector<32x512xf32> to vector<1x512xf32>
    %166 = vector.broadcast %164 : vector<2x1xf32> to vector<2x512xf32>
    %167 = vector.broadcast %165 : vector<1x512xf32> to vector<2x512xf32>
    %168 = arith.mulf %166, %167 : vector<2x512xf32>
    %169 = arith.addf %163, %168 : vector<2x512xf32>
    %170 = vector.extract_strided_slice %119 {offsets = [0, 8], sizes = [2, 1], strides = [1, 1]} : vector<2x32xf32> to vector<2x1xf32>
    %171 = vector.extract_strided_slice %118 {offsets = [8, 0], sizes = [1, 512], strides = [1, 1]} : vector<32x512xf32> to vector<1x512xf32>
    %172 = vector.broadcast %170 : vector<2x1xf32> to vector<2x512xf32>
    %173 = vector.broadcast %171 : vector<1x512xf32> to vector<2x512xf32>
    %174 = arith.mulf %172, %173 : vector<2x512xf32>
    %175 = arith.addf %169, %174 : vector<2x512xf32>
    %176 = vector.extract_strided_slice %119 {offsets = [0, 9], sizes = [2, 1], strides = [1, 1]} : vector<2x32xf32> to vector<2x1xf32>
    %177 = vector.extract_strided_slice %118 {offsets = [9, 0], sizes = [1, 512], strides = [1, 1]} : vector<32x512xf32> to vector<1x512xf32>
    %178 = vector.broadcast %176 : vector<2x1xf32> to vector<2x512xf32>
    %179 = vector.broadcast %177 : vector<1x512xf32> to vector<2x512xf32>
    %180 = arith.mulf %178, %179 : vector<2x512xf32>
    %181 = arith.addf %175, %180 : vector<2x512xf32>
    %182 = vector.extract_strided_slice %119 {offsets = [0, 10], sizes = [2, 1], strides = [1, 1]} : vector<2x32xf32> to vector<2x1xf32>
    %183 = vector.extract_strided_slice %118 {offsets = [10, 0], sizes = [1, 512], strides = [1, 1]} : vector<32x512xf32> to vector<1x512xf32>
    %184 = vector.broadcast %182 : vector<2x1xf32> to vector<2x512xf32>
    %185 = vector.broadcast %183 : vector<1x512xf32> to vector<2x512xf32>
    %186 = arith.mulf %184, %185 : vector<2x512xf32>
    %187 = arith.addf %181, %186 : vector<2x512xf32>
    %188 = vector.extract_strided_slice %119 {offsets = [0, 11], sizes = [2, 1], strides = [1, 1]} : vector<2x32xf32> to vector<2x1xf32>
    %189 = vector.extract_strided_slice %118 {offsets = [11, 0], sizes = [1, 512], strides = [1, 1]} : vector<32x512xf32> to vector<1x512xf32>
    %190 = vector.broadcast %188 : vector<2x1xf32> to vector<2x512xf32>
    %191 = vector.broadcast %189 : vector<1x512xf32> to vector<2x512xf32>
    %192 = arith.mulf %190, %191 : vector<2x512xf32>
    %193 = arith.addf %187, %192 : vector<2x512xf32>
    %194 = vector.extract_strided_slice %119 {offsets = [0, 12], sizes = [2, 1], strides = [1, 1]} : vector<2x32xf32> to vector<2x1xf32>
    %195 = vector.extract_strided_slice %118 {offsets = [12, 0], sizes = [1, 512], strides = [1, 1]} : vector<32x512xf32> to vector<1x512xf32>
    %196 = vector.broadcast %194 : vector<2x1xf32> to vector<2x512xf32>
    %197 = vector.broadcast %195 : vector<1x512xf32> to vector<2x512xf32>
    %198 = arith.mulf %196, %197 : vector<2x512xf32>
    %199 = arith.addf %193, %198 : vector<2x512xf32>
    %200 = vector.extract_strided_slice %119 {offsets = [0, 13], sizes = [2, 1], strides = [1, 1]} : vector<2x32xf32> to vector<2x1xf32>
    %201 = vector.extract_strided_slice %118 {offsets = [13, 0], sizes = [1, 512], strides = [1, 1]} : vector<32x512xf32> to vector<1x512xf32>
    %202 = vector.broadcast %200 : vector<2x1xf32> to vector<2x512xf32>
    %203 = vector.broadcast %201 : vector<1x512xf32> to vector<2x512xf32>
    %204 = arith.mulf %202, %203 : vector<2x512xf32>
    %205 = arith.addf %199, %204 : vector<2x512xf32>
    %206 = vector.extract_strided_slice %119 {offsets = [0, 14], sizes = [2, 1], strides = [1, 1]} : vector<2x32xf32> to vector<2x1xf32>
    %207 = vector.extract_strided_slice %118 {offsets = [14, 0], sizes = [1, 512], strides = [1, 1]} : vector<32x512xf32> to vector<1x512xf32>
    %208 = vector.broadcast %206 : vector<2x1xf32> to vector<2x512xf32>
    %209 = vector.broadcast %207 : vector<1x512xf32> to vector<2x512xf32>
    %210 = arith.mulf %208, %209 : vector<2x512xf32>
    %211 = arith.addf %205, %210 : vector<2x512xf32>
    %212 = vector.extract_strided_slice %119 {offsets = [0, 15], sizes = [2, 1], strides = [1, 1]} : vector<2x32xf32> to vector<2x1xf32>
    %213 = vector.extract_strided_slice %118 {offsets = [15, 0], sizes = [1, 512], strides = [1, 1]} : vector<32x512xf32> to vector<1x512xf32>
    %214 = vector.broadcast %212 : vector<2x1xf32> to vector<2x512xf32>
    %215 = vector.broadcast %213 : vector<1x512xf32> to vector<2x512xf32>
    %216 = arith.mulf %214, %215 : vector<2x512xf32>
    %217 = arith.addf %211, %216 : vector<2x512xf32>
    %218 = vector.extract_strided_slice %119 {offsets = [0, 16], sizes = [2, 1], strides = [1, 1]} : vector<2x32xf32> to vector<2x1xf32>
    %219 = vector.extract_strided_slice %118 {offsets = [16, 0], sizes = [1, 512], strides = [1, 1]} : vector<32x512xf32> to vector<1x512xf32>
    %220 = vector.broadcast %218 : vector<2x1xf32> to vector<2x512xf32>
    %221 = vector.broadcast %219 : vector<1x512xf32> to vector<2x512xf32>
    %222 = arith.mulf %220, %221 : vector<2x512xf32>
    %223 = arith.addf %217, %222 : vector<2x512xf32>
    %224 = vector.extract_strided_slice %119 {offsets = [0, 17], sizes = [2, 1], strides = [1, 1]} : vector<2x32xf32> to vector<2x1xf32>
    %225 = vector.extract_strided_slice %118 {offsets = [17, 0], sizes = [1, 512], strides = [1, 1]} : vector<32x512xf32> to vector<1x512xf32>
    %226 = vector.broadcast %224 : vector<2x1xf32> to vector<2x512xf32>
    %227 = vector.broadcast %225 : vector<1x512xf32> to vector<2x512xf32>
    %228 = arith.mulf %226, %227 : vector<2x512xf32>
    %229 = arith.addf %223, %228 : vector<2x512xf32>
    %230 = vector.extract_strided_slice %119 {offsets = [0, 18], sizes = [2, 1], strides = [1, 1]} : vector<2x32xf32> to vector<2x1xf32>
    %231 = vector.extract_strided_slice %118 {offsets = [18, 0], sizes = [1, 512], strides = [1, 1]} : vector<32x512xf32> to vector<1x512xf32>
    %232 = vector.broadcast %230 : vector<2x1xf32> to vector<2x512xf32>
    %233 = vector.broadcast %231 : vector<1x512xf32> to vector<2x512xf32>
    %234 = arith.mulf %232, %233 : vector<2x512xf32>
    %235 = arith.addf %229, %234 : vector<2x512xf32>
    %236 = vector.extract_strided_slice %119 {offsets = [0, 19], sizes = [2, 1], strides = [1, 1]} : vector<2x32xf32> to vector<2x1xf32>
    %237 = vector.extract_strided_slice %118 {offsets = [19, 0], sizes = [1, 512], strides = [1, 1]} : vector<32x512xf32> to vector<1x512xf32>
    %238 = vector.broadcast %236 : vector<2x1xf32> to vector<2x512xf32>
    %239 = vector.broadcast %237 : vector<1x512xf32> to vector<2x512xf32>
    %240 = arith.mulf %238, %239 : vector<2x512xf32>
    %241 = arith.addf %235, %240 : vector<2x512xf32>
    %242 = vector.extract_strided_slice %119 {offsets = [0, 20], sizes = [2, 1], strides = [1, 1]} : vector<2x32xf32> to vector<2x1xf32>
    %243 = vector.extract_strided_slice %118 {offsets = [20, 0], sizes = [1, 512], strides = [1, 1]} : vector<32x512xf32> to vector<1x512xf32>
    %244 = vector.broadcast %242 : vector<2x1xf32> to vector<2x512xf32>
    %245 = vector.broadcast %243 : vector<1x512xf32> to vector<2x512xf32>
    %246 = arith.mulf %244, %245 : vector<2x512xf32>
    %247 = arith.addf %241, %246 : vector<2x512xf32>
    %248 = vector.extract_strided_slice %119 {offsets = [0, 21], sizes = [2, 1], strides = [1, 1]} : vector<2x32xf32> to vector<2x1xf32>
    %249 = vector.extract_strided_slice %118 {offsets = [21, 0], sizes = [1, 512], strides = [1, 1]} : vector<32x512xf32> to vector<1x512xf32>
    %250 = vector.broadcast %248 : vector<2x1xf32> to vector<2x512xf32>
    %251 = vector.broadcast %249 : vector<1x512xf32> to vector<2x512xf32>
    %252 = arith.mulf %250, %251 : vector<2x512xf32>
    %253 = arith.addf %247, %252 : vector<2x512xf32>
    %254 = vector.extract_strided_slice %119 {offsets = [0, 22], sizes = [2, 1], strides = [1, 1]} : vector<2x32xf32> to vector<2x1xf32>
    %255 = vector.extract_strided_slice %118 {offsets = [22, 0], sizes = [1, 512], strides = [1, 1]} : vector<32x512xf32> to vector<1x512xf32>
    %256 = vector.broadcast %254 : vector<2x1xf32> to vector<2x512xf32>
    %257 = vector.broadcast %255 : vector<1x512xf32> to vector<2x512xf32>
    %258 = arith.mulf %256, %257 : vector<2x512xf32>
    %259 = arith.addf %253, %258 : vector<2x512xf32>
    %260 = vector.extract_strided_slice %119 {offsets = [0, 23], sizes = [2, 1], strides = [1, 1]} : vector<2x32xf32> to vector<2x1xf32>
    %261 = vector.extract_strided_slice %118 {offsets = [23, 0], sizes = [1, 512], strides = [1, 1]} : vector<32x512xf32> to vector<1x512xf32>
    %262 = vector.broadcast %260 : vector<2x1xf32> to vector<2x512xf32>
    %263 = vector.broadcast %261 : vector<1x512xf32> to vector<2x512xf32>
    %264 = arith.mulf %262, %263 : vector<2x512xf32>
    %265 = arith.addf %259, %264 : vector<2x512xf32>
    %266 = vector.extract_strided_slice %119 {offsets = [0, 24], sizes = [2, 1], strides = [1, 1]} : vector<2x32xf32> to vector<2x1xf32>
    %267 = vector.extract_strided_slice %118 {offsets = [24, 0], sizes = [1, 512], strides = [1, 1]} : vector<32x512xf32> to vector<1x512xf32>
    %268 = vector.broadcast %266 : vector<2x1xf32> to vector<2x512xf32>
    %269 = vector.broadcast %267 : vector<1x512xf32> to vector<2x512xf32>
    %270 = arith.mulf %268, %269 : vector<2x512xf32>
    %271 = arith.addf %265, %270 : vector<2x512xf32>
    %272 = vector.extract_strided_slice %119 {offsets = [0, 25], sizes = [2, 1], strides = [1, 1]} : vector<2x32xf32> to vector<2x1xf32>
    %273 = vector.extract_strided_slice %118 {offsets = [25, 0], sizes = [1, 512], strides = [1, 1]} : vector<32x512xf32> to vector<1x512xf32>
    %274 = vector.broadcast %272 : vector<2x1xf32> to vector<2x512xf32>
    %275 = vector.broadcast %273 : vector<1x512xf32> to vector<2x512xf32>
    %276 = arith.mulf %274, %275 : vector<2x512xf32>
    %277 = arith.addf %271, %276 : vector<2x512xf32>
    %278 = vector.extract_strided_slice %119 {offsets = [0, 26], sizes = [2, 1], strides = [1, 1]} : vector<2x32xf32> to vector<2x1xf32>
    %279 = vector.extract_strided_slice %118 {offsets = [26, 0], sizes = [1, 512], strides = [1, 1]} : vector<32x512xf32> to vector<1x512xf32>
    %280 = vector.broadcast %278 : vector<2x1xf32> to vector<2x512xf32>
    %281 = vector.broadcast %279 : vector<1x512xf32> to vector<2x512xf32>
    %282 = arith.mulf %280, %281 : vector<2x512xf32>
    %283 = arith.addf %277, %282 : vector<2x512xf32>
    %284 = vector.extract_strided_slice %119 {offsets = [0, 27], sizes = [2, 1], strides = [1, 1]} : vector<2x32xf32> to vector<2x1xf32>
    %285 = vector.extract_strided_slice %118 {offsets = [27, 0], sizes = [1, 512], strides = [1, 1]} : vector<32x512xf32> to vector<1x512xf32>
    %286 = vector.broadcast %284 : vector<2x1xf32> to vector<2x512xf32>
    %287 = vector.broadcast %285 : vector<1x512xf32> to vector<2x512xf32>
    %288 = arith.mulf %286, %287 : vector<2x512xf32>
    %289 = arith.addf %283, %288 : vector<2x512xf32>
    %290 = vector.extract_strided_slice %119 {offsets = [0, 28], sizes = [2, 1], strides = [1, 1]} : vector<2x32xf32> to vector<2x1xf32>
    %291 = vector.extract_strided_slice %118 {offsets = [28, 0], sizes = [1, 512], strides = [1, 1]} : vector<32x512xf32> to vector<1x512xf32>
    %292 = vector.broadcast %290 : vector<2x1xf32> to vector<2x512xf32>
    %293 = vector.broadcast %291 : vector<1x512xf32> to vector<2x512xf32>
    %294 = arith.mulf %292, %293 : vector<2x512xf32>
    %295 = arith.addf %289, %294 : vector<2x512xf32>
    %296 = vector.extract_strided_slice %119 {offsets = [0, 29], sizes = [2, 1], strides = [1, 1]} : vector<2x32xf32> to vector<2x1xf32>
    %297 = vector.extract_strided_slice %118 {offsets = [29, 0], sizes = [1, 512], strides = [1, 1]} : vector<32x512xf32> to vector<1x512xf32>
    %298 = vector.broadcast %296 : vector<2x1xf32> to vector<2x512xf32>
    %299 = vector.broadcast %297 : vector<1x512xf32> to vector<2x512xf32>
    %300 = arith.mulf %298, %299 : vector<2x512xf32>
    %301 = arith.addf %295, %300 : vector<2x512xf32>
    %302 = vector.extract_strided_slice %119 {offsets = [0, 30], sizes = [2, 1], strides = [1, 1]} : vector<2x32xf32> to vector<2x1xf32>
    %303 = vector.extract_strided_slice %118 {offsets = [30, 0], sizes = [1, 512], strides = [1, 1]} : vector<32x512xf32> to vector<1x512xf32>
    %304 = vector.broadcast %302 : vector<2x1xf32> to vector<2x512xf32>
    %305 = vector.broadcast %303 : vector<1x512xf32> to vector<2x512xf32>
    %306 = arith.mulf %304, %305 : vector<2x512xf32>
    %307 = arith.addf %301, %306 : vector<2x512xf32>
    %308 = vector.extract_strided_slice %119 {offsets = [0, 31], sizes = [2, 1], strides = [1, 1]} : vector<2x32xf32> to vector<2x1xf32>
    %309 = vector.extract_strided_slice %118 {offsets = [31, 0], sizes = [1, 512], strides = [1, 1]} : vector<32x512xf32> to vector<1x512xf32>
    %310 = vector.broadcast %308 : vector<2x1xf32> to vector<2x512xf32>
    %311 = vector.broadcast %309 : vector<1x512xf32> to vector<2x512xf32>
    %312 = arith.mulf %310, %311 : vector<2x512xf32>
    %313 = arith.addf %307, %312 : vector<2x512xf32>
    %c0_14 = arith.constant 0 : index
    %c0_15 = arith.constant 0 : index
    %314 = vector.load %arg8[%c0_14, %c0_15] : memref<2x512xf32, #tpu.memory_space<vmem>>, vector<2x512xf32>
    tpu.vector_store %arg8[%c0_14, %c0_15], %313 {strides = array<i32>} : memref<2x512xf32, #tpu.memory_space<vmem>>, vector<2x512xf32>,
    return
  }
  func.func @transform_0(%arg0: i32) -> (i32, i32) {
    %c0_i32 = arith.constant 0 : i32
    %c0_i32_0 = arith.constant 0 : i32
    return %c0_i32, %arg0 : i32, i32
  }
  func.func @transform_1(%arg0: i32) -> (i32, i32) {
    %c0_i32 = arith.constant 0 : i32
    %c0_i32_0 = arith.constant 0 : i32
    %c0_i32_1 = arith.constant 0 : i32
    return %c0_i32, %c0_i32_0 : i32, i32
  }
  func.func @transform_2(%arg0: i32) -> (i32, i32) {
    %c0_i32 = arith.constant 0 : i32
    %c0_i32_0 = arith.constant 0 : i32
    %c0_i32_1 = arith.constant 0 : i32
    return %c0_i32, %c0_i32_0 : i32, i32
  }
  func.func @transform_3(%arg0: i32) -> (i32, i32) {
    %c0_i32 = arith.constant 0 : i32
    %c0_i32_0 = arith.constant 0 : i32
    %c0_i32_1 = arith.constant 0 : i32
    return %c0_i32, %c0_i32_0 : i32, i32
  }
  func.func @transform_4(%arg0: i32) -> (i32, i32) {
    %c0_i32 = arith.constant 0 : i32
    %c0_i32_0 = arith.constant 0 : i32
    %c0_i32_1 = arith.constant 0 : i32
    return %c0_i32, %c0_i32_0 : i32, i32
  }
  func.func @transform_5(%arg0: i32) -> (i32, i32) {
    %c0_i32 = arith.constant 0 : i32
    %c0_i32_0 = arith.constant 0 : i32
    %c0_i32_1 = arith.constant 0 : i32
    return %c0_i32, %c0_i32_0 : i32, i32
  }
  func.func @transform_6(%arg0: i32) -> (i32, i32) {
    %c0_i32 = arith.constant 0 : i32
    %c0_i32_0 = arith.constant 0 : i32
    %c0_i32_1 = arith.constant 0 : i32
    return %c0_i32, %c0_i32_0 : i32, i32
  }
  func.func @transform_7(%arg0: i32) -> (i32, i32) {
    %c0_i32 = arith.constant 0 : i32
    %c0_i32_0 = arith.constant 0 : i32
    return %c0_i32, %arg0 : i32, i32
  }
}

</mosaic_0001>

<llo_original>
// kernel: generator_forward.1
$region0: #{generator_forward.1}
  #allocation0 [shape = 'u32[]', space=smem, size = 0x4, offset = 0x4, fixed_abs, tag = 'smem constant byte address 0x4 - core index']
  #allocation1 [shape = 'u32[72,128]{1,0:T(1,128)}', space=vmem, size = 0x9000, scoped, tag = 'internal scratch']
  %s0 = inlined_call_operand.vmem [shape: f32[2,8], index: 0, kind: input, shape index: {}]
  %s1 = inlined_call_operand.vmem [shape: f32[16,2], index: 1, kind: input, shape index: {}]
  %s2 = inlined_call_operand.vmem [shape: f32[16,1], index: 2, kind: input, shape index: {}]
  %s3 = inlined_call_operand.vmem [shape: f32[32,16], index: 3, kind: input, shape index: {}]
  %s4 = inlined_call_operand.vmem [shape: f32[32,1], index: 4, kind: input, shape index: {}]
  %s5 = inlined_call_operand.vmem [shape: f32[2,32], index: 5, kind: input, shape index: {}]
  %s6 = inlined_call_operand.vmem [shape: f32[2,1], index: 6, kind: input, shape index: {}]
  %s7 = inlined_call_operand.hbm [shape: f32[2,8], index: 7, kind: output, shape index: {}]
  %s8 = sld [smem:[#allocation0]]
  $region38: #{generator_forward.1} parent=0
    _
  %s10 = ssub.s32 1, %s8
  %s11 = scalar_select 0, %s10, %s8
  $region1: #{generator_forward.1} parent=0
    #allocation2 [shape = 'u8[4096]{0}', space=vmem, size = 0x1000, scoped, tag = 'output window, operand 0, single buffered']
    #allocation3 [shape = 's32[1]{0}', space=sflag, size = 0x4, scoped, tag = 'scoped memory for generator_forward.1']
    %12 = vsyncpa [#allocation3], 0
    // Predicated region
    $region2: #{generator_forward.1} parent=1 // pred_check
      _
    $region3: #{generator_forward.1} parent=1 // pred_check_branch
      %14 = sbr.rel (0) target = $region5
    $region4: #{generator_forward.1} parent=1 // pred_region
      _
    $region5: #{generator_forward.1} parent=1 // pred_fallthru
      _
    // Predicated region
    $region6: #{generator_forward.1} parent=1 // pred_check
      _
    $region7: #{generator_forward.1} parent=1 // pred_check_branch
      %16 = sbr.rel (0) target = $region9
    $region8: #{generator_forward.1} parent=1 // pred_region
      _
    $region9: #{generator_forward.1} parent=1 // pred_fallthru
      _
    // Predicated region
    $region10: #{generator_forward.1} parent=1 // pred_check
      _
    $region11: #{generator_forward.1} parent=1 // pred_check_branch
      %18 = sbr.rel (0) target = $region13
    $region12: #{generator_forward.1} parent=1 // pred_region
      _
    $region13: #{generator_forward.1} parent=1 // pred_fallthru
      _
    // Predicated region
    $region14: #{generator_forward.1} parent=1 // pred_check
      _
    $region15: #{generator_forward.1} parent=1 // pred_check_branch
      %20 = sbr.rel (0) target = $region17
    $region16: #{generator_forward.1} parent=1 // pred_region
      _
    $region17: #{generator_forward.1} parent=1 // pred_fallthru
      _
    // Predicated region
    $region18: #{generator_forward.1} parent=1 // pred_check
      _
    $region19: #{generator_forward.1} parent=1 // pred_check_branch
      %22 = sbr.rel (0) target = $region21
    $region20: #{generator_forward.1} parent=1 // pred_region
      _
    $region21: #{generator_forward.1} parent=1 // pred_fallthru
      _
    // Predicated region
    $region22: #{generator_forward.1} parent=1 // pred_check
      _
    $region23: #{generator_forward.1} parent=1 // pred_check_branch
      %24 = sbr.rel (0) target = $region25
    $region24: #{generator_forward.1} parent=1 // pred_region
      _
    $region25: #{generator_forward.1} parent=1 // pred_fallthru
      _
    // Predicated region
    $region26: #{generator_forward.1} parent=1 // pred_check
      _
    $region27: #{generator_forward.1} parent=1 // pred_check_branch
      %26 = sbr.rel (0) target = $region29
    $region28: #{generator_forward.1} parent=1 // pred_region
      _
    $region29: #{generator_forward.1} parent=1 // pred_fallthru
      _
    %v27 = vld [vmem:[%s0] sm:$0xff]
    %v28 = vld [vmem:[%s1] sm:$0xff]
    %v29 = vld [vmem:[%s1 + $0x8] sm:$0xff]
    %v30 = vld [vmem:[%s2] sm:$0xff]
    %v31 = vld [vmem:[%s2 + $0x8] sm:$0xff]
    %33 = vset.pattern.permute.xlu0 0
    %34 = vperm.xlu0 %33, %v28
    %v35 = vpop.permute.xlu0 %34
    %38 = vset.pattern.permute.xlu0 0
    %39 = vperm.xlu0 %38, %v29
    %v40 = vpop.permute.xlu0 %39
    %v43 = vperm.slane %v27, 0
    %v44 = vperm.slane %v27, 2
    %v45 = vperm.slane %v27, 4
    %v46 = vperm.slane %v27, 6
    %v51 = vperm.slane %v43, 0
    %v52 = vperm.slane %v44, 0
    %v53 = vperm.slane %v45, 0
    %v54 = vperm.slane %v46, 0
    %v55 = vmul.f32 %v35, %v51
    %v56 = vmul.f32 %v35, %v52
    %v57 = vmul.f32 %v35, %v53
    %v58 = vmul.f32 %v35, %v54
    %v59 = vmul.f32 %v40, %v51
    %v60 = vmul.f32 %v40, %v52
    %v61 = vmul.f32 %v40, %v53
    %v62 = vmul.f32 %v40, %v54
    %64 = vset.pattern.permute.xlu0 0
    %65 = vperm.xlu0 %64, %v30
    %v66 = vpop.permute.xlu0 %65
    %69 = vset.pattern.permute.xlu0 0
    %70 = vperm.xlu0 %69, %v31
    %v71 = vpop.permute.xlu0 %70
    %v73 = vadd.f32 %v66, %v55
    %v74 = vadd.f32 %v66, %v56
    %v75 = vadd.f32 %v66, %v57
    %v76 = vadd.f32 %v66, %v58
    %v77 = vadd.f32 %v71, %v59
    %v78 = vadd.f32 %v71, %v60
    %v79 = vadd.f32 %v71, %v61
    %v80 = vadd.f32 %v71, %v62
    %81 = vset.pattern.permute.xlu0 1
    %82 = vperm.xlu0 %81, %v28
    %v83 = vpop.permute.xlu0 %82
    %85 = vset.pattern.permute.xlu0 1
    %86 = vperm.xlu0 %85, %v29
    %v87 = vpop.permute.xlu0 %86
    %v89 = vperm.slane %v27, 1
    %v90 = vperm.slane %v27, 3
    %v91 = vperm.slane %v27, 5
    %v92 = vperm.slane %v27, 7
    %v97 = vperm.slane %v89, 1
    %v98 = vperm.slane %v90, 1
    %v99 = vperm.slane %v91, 1
    %v100 = vperm.slane %v92, 1
    %v101 = vmul.f32 %v83, %v97
    %v102 = vmul.f32 %v83, %v98
    %v103 = vmul.f32 %v83, %v99
    %v104 = vmul.f32 %v83, %v100
    %v105 = vmul.f32 %v87, %v97
    %v106 = vmul.f32 %v87, %v98
    %v107 = vmul.f32 %v87, %v99
    %v108 = vmul.f32 %v87, %v100
    %v109 = vadd.f32 %v73, %v101
    %v110 = vadd.f32 %v74, %v102
    %v111 = vadd.f32 %v75, %v103
    %v112 = vadd.f32 %v76, %v104
    %v113 = vadd.f32 %v77, %v105
    %v114 = vadd.f32 %v78, %v106
    %v115 = vadd.f32 %v79, %v107
    %v116 = vadd.f32 %v80, %v108
    %v117 = vmax.f32 %v109, 0.0
    %v118 = vmax.f32 %v110, 0.0
    %v119 = vmax.f32 %v111, 0.0
    %v120 = vmax.f32 %v112, 0.0
    %v121 = vmax.f32 %v113, 0.0
    %v122 = vmax.f32 %v114, 0.0
    %v123 = vmax.f32 %v115, 0.0
    %v124 = vmax.f32 %v116, 0.0
    %v125 = vld [vmem:[%s3] sm:$0xff]
    %v126 = vld [vmem:[%s3 + $0x8] sm:$0xff]
    %v127 = vld [vmem:[%s3 + $0x10] sm:$0xff]
    %v128 = vld [vmem:[%s3 + $0x18] sm:$0xff]
    %v129 = vld [vmem:[%s4] sm:$0xff]
    %v130 = vld [vmem:[%s4 + $0x8] sm:$0xff]
    %v131 = vld [vmem:[%s4 + $0x10] sm:$0xff]
    %v132 = vld [vmem:[%s4 + $0x18] sm:$0xff]
    %134 = vset.pattern.permute.xlu0 0
    %135 = vperm.xlu0 %134, %v125
    %v136 = vpop.permute.xlu0 %135
    %139 = vset.pattern.permute.xlu0 0
    %140 = vperm.xlu0 %139, %v126
    %v141 = vpop.permute.xlu0 %140
    %144 = vset.pattern.permute.xlu0 0
    %145 = vperm.xlu0 %144, %v127
    %v146 = vpop.permute.xlu0 %145
    %149 = vset.pattern.permute.xlu0 0
    %150 = vperm.xlu0 %149, %v128
    %v151 = vpop.permute.xlu0 %150
    %v153 = vperm.slane %v117, 0
    %v154 = vperm.slane %v118, 0
    %v155 = vperm.slane %v119, 0
    %v156 = vperm.slane %v120, 0
    %v157 = vmul.f32 %v136, %v153
    %v158 = vmul.f32 %v136, %v154
    %v159 = vmul.f32 %v136, %v155
    %v160 = vmul.f32 %v136, %v156
    %v161 = vmul.f32 %v141, %v153
    %v162 = vmul.f32 %v141, %v154
    %v163 = vmul.f32 %v141, %v155
    %v164 = vmul.f32 %v141, %v156
    %v165 = vmul.f32 %v146, %v153
    %v166 = vmul.f32 %v146, %v154
    %v167 = vmul.f32 %v146, %v155
    %v168 = vmul.f32 %v146, %v156
    %v169 = vmul.f32 %v151, %v153
    %v170 = vmul.f32 %v151, %v154
    %v171 = vmul.f32 %v151, %v155
    %v172 = vmul.f32 %v151, %v156
    %174 = vset.pattern.permute.xlu0 0
    %175 = vperm.xlu0 %174, %v129
    %v176 = vpop.permute.xlu0 %175
    %179 = vset.pattern.permute.xlu0 0
    %180 = vperm.xlu0 %179, %v130
    %v181 = vpop.permute.xlu0 %180
    %184 = vset.pattern.permute.xlu0 0
    %185 = vperm.xlu0 %184, %v131
    %v186 = vpop.permute.xlu0 %185
    %189 = vset.pattern.permute.xlu0 0
    %190 = vperm.xlu0 %189, %v132
    %v191 = vpop.permute.xlu0 %190
    %v193 = vadd.f32 %v176, %v157
    %v194 = vadd.f32 %v176, %v158
    %v195 = vadd.f32 %v176, %v159
    %v196 = vadd.f32 %v176, %v160
    %v197 = vadd.f32 %v181, %v161
    %v198 = vadd.f32 %v181, %v162
    %v199 = vadd.f32 %v181, %v163
    %v200 = vadd.f32 %v181, %v164
    %v201 = vadd.f32 %v186, %v165
    %v202 = vadd.f32 %v186, %v166
    %v203 = vadd.f32 %v186, %v167
    %v204 = vadd.f32 %v186, %v168
    %v205 = vadd.f32 %v191, %v169
    %v206 = vadd.f32 %v191, %v170
    %v207 = vadd.f32 %v191, %v171
    %v208 = vadd.f32 %v191, %v172
    %209 = vset.pattern.permute.xlu0 1
    %210 = vperm.xlu0 %209, %v125
    %v211 = vpop.permute.xlu0 %210
    %213 = vset.pattern.permute.xlu0 1
    %214 = vperm.xlu0 %213, %v126
    %v215 = vpop.permute.xlu0 %214
    %217 = vset.pattern.permute.xlu0 1
    %218 = vperm.xlu0 %217, %v127
    %v219 = vpop.permute.xlu0 %218
    %221 = vset.pattern.permute.xlu0 1
    %222 = vperm.xlu0 %221, %v128
    %v223 = vpop.permute.xlu0 %222
    %v225 = vperm.slane %v117, 1
    %v226 = vperm.slane %v118, 1
    %v227 = vperm.slane %v119, 1
    %v228 = vperm.slane %v120, 1
    %v229 = vmul.f32 %v211, %v225
    %v230 = vmul.f32 %v211, %v226
    %v231 = vmul.f32 %v211, %v227
    %v232 = vmul.f32 %v211, %v228
    %v233 = vmul.f32 %v215, %v225
    %v234 = vmul.f32 %v215, %v226
    %v235 = vmul.f32 %v215, %v227
    %v236 = vmul.f32 %v215, %v228
    %v237 = vmul.f32 %v219, %v225
    %v238 = vmul.f32 %v219, %v226
    %v239 = vmul.f32 %v219, %v227
    %v240 = vmul.f32 %v219, %v228
    %v241 = vmul.f32 %v223, %v225
    %v242 = vmul.f32 %v223, %v226
    %v243 = vmul.f32 %v223, %v227
    %v244 = vmul.f32 %v223, %v228
    %v245 = vadd.f32 %v193, %v229
    %v246 = vadd.f32 %v194, %v230
    %v247 = vadd.f32 %v195, %v231
    %v248 = vadd.f32 %v196, %v232
    %v249 = vadd.f32 %v197, %v233
    %v250 = vadd.f32 %v198, %v234
    %v251 = vadd.f32 %v199, %v235
    %v252 = vadd.f32 %v200, %v236
    %v253 = vadd.f32 %v201, %v237
    %v254 = vadd.f32 %v202, %v238
    %v255 = vadd.f32 %v203, %v239
    %v256 = vadd.f32 %v204, %v240
    %v257 = vadd.f32 %v205, %v241
    %v258 = vadd.f32 %v206, %v242
    %v259 = vadd.f32 %v207, %v243
    %v260 = vadd.f32 %v208, %v244
    %261 = vset.pattern.permute.xlu0 2
    %262 = vperm.xlu0 %261, %v125
    %v263 = vpop.permute.xlu0 %262
    %265 = vset.pattern.permute.xlu0 2
    %266 = vperm.xlu0 %265, %v126
    %v267 = vpop.permute.xlu0 %266
    %269 = vset.pattern.permute.xlu0 2
    %270 = vperm.xlu0 %269, %v127
    %v271 = vpop.permute.xlu0 %270
    %273 = vset.pattern.permute.xlu0 2
    %274 = vperm.xlu0 %273, %v128
    %v275 = vpop.permute.xlu0 %274
    %v277 = vperm.slane %v117, 2
    %v278 = vperm.slane %v118, 2
    %v279 = vperm.slane %v119, 2
    %v280 = vperm.slane %v120, 2
    %v281 = vmul.f32 %v263, %v277
    %v282 = vmul.f32 %v263, %v278
    %v283 = vmul.f32 %v263, %v279
    %v284 = vmul.f32 %v263, %v280
    %v285 = vmul.f32 %v267, %v277
    %v286 = vmul.f32 %v267, %v278
    %v287 = vmul.f32 %v267, %v279
    %v288 = vmul.f32 %v267, %v280
    %v289 = vmul.f32 %v271, %v277
    %v290 = vmul.f32 %v271, %v278
    %v291 = vmul.f32 %v271, %v279
    %v292 = vmul.f32 %v271, %v280
    %v293 = vmul.f32 %v275, %v277
    %v294 = vmul.f32 %v275, %v278
    %v295 = vmul.f32 %v275, %v279
    %v296 = vmul.f32 %v275, %v280
    %v297 = vadd.f32 %v245, %v281
    %v298 = vadd.f32 %v246, %v282
    %v299 = vadd.f32 %v247, %v283
    %v300 = vadd.f32 %v248, %v284
    %v301 = vadd.f32 %v249, %v285
    %v302 = vadd.f32 %v250, %v286
    %v303 = vadd.f32 %v251, %v287
    %v304 = vadd.f32 %v252, %v288
    %v305 = vadd.f32 %v253, %v289
    %v306 = vadd.f32 %v254, %v290
    %v307 = vadd.f32 %v255, %v291
    %v308 = vadd.f32 %v256, %v292
    %v309 = vadd.f32 %v257, %v293
    %v310 = vadd.f32 %v258, %v294
    %v311 = vadd.f32 %v259, %v295
    %v312 = vadd.f32 %v260, %v296
    %313 = vset.pattern.permute.xlu0 3
    %314 = vperm.xlu0 %313, %v125
    %v315 = vpop.permute.xlu0 %314
    %317 = vset.pattern.permute.xlu0 3
    %318 = vperm.xlu0 %317, %v126
    %v319 = vpop.permute.xlu0 %318
    %321 = vset.pattern.permute.xlu0 3
    %322 = vperm.xlu0 %321, %v127
    %v323 = vpop.permute.xlu0 %322
    %325 = vset.pattern.permute.xlu0 3
    %326 = vperm.xlu0 %325, %v128
    %v327 = vpop.permute.xlu0 %326
    %v329 = vperm.slane %v117, 3
    %v330 = vperm.slane %v118, 3
    %v331 = vperm.slane %v119, 3
    %v332 = vperm.slane %v120, 3
    %v333 = vmul.f32 %v315, %v329
    %v334 = vmul.f32 %v315, %v330
    %v335 = vmul.f32 %v315, %v331
    %v336 = vmul.f32 %v315, %v332
    %v337 = vmul.f32 %v319, %v329
    %v338 = vmul.f32 %v319, %v330
    %v339 = vmul.f32 %v319, %v331
    %v340 = vmul.f32 %v319, %v332
    %v341 = vmul.f32 %v323, %v329
    %v342 = vmul.f32 %v323, %v330
    %v343 = vmul.f32 %v323, %v331
    %v344 = vmul.f32 %v323, %v332
    %v345 = vmul.f32 %v327, %v329
    %v346 = vmul.f32 %v327, %v330
    %v347 = vmul.f32 %v327, %v331
    %v348 = vmul.f32 %v327, %v332
    %v349 = vadd.f32 %v297, %v333
    %v350 = vadd.f32 %v298, %v334
    %v351 = vadd.f32 %v299, %v335
    %v352 = vadd.f32 %v300, %v336
    %v353 = vadd.f32 %v301, %v337
    %v354 = vadd.f32 %v302, %v338
    %v355 = vadd.f32 %v303, %v339
    %v356 = vadd.f32 %v304, %v340
    %v357 = vadd.f32 %v305, %v341
    %v358 = vadd.f32 %v306, %v342
    %v359 = vadd.f32 %v307, %v343
    %v360 = vadd.f32 %v308, %v344
    %v361 = vadd.f32 %v309, %v345
    %v362 = vadd.f32 %v310, %v346
    %v363 = vadd.f32 %v311, %v347
    %v364 = vadd.f32 %v312, %v348
    %365 = vset.pattern.permute.xlu0 4
    %366 = vperm.xlu0 %365, %v125
    %v367 = vpop.permute.xlu0 %366
    %369 = vset.pattern.permute.xlu0 4
    %370 = vperm.xlu0 %369, %v126
    %v371 = vpop.permute.xlu0 %370
    %373 = vset.pattern.permute.xlu0 4
    %374 = vperm.xlu0 %373, %v127
    %v375 = vpop.permute.xlu0 %374
    %377 = vset.pattern.permute.xlu0 4
    %378 = vperm.xlu0 %377, %v128
    %v379 = vpop.permute.xlu0 %378
    %v381 = vperm.slane %v117, 4
    %v382 = vperm.slane %v118, 4
    %v383 = vperm.slane %v119, 4
    %v384 = vperm.slane %v120, 4
    %v385 = vmul.f32 %v367, %v381
    %v386 = vmul.f32 %v367, %v382
    %v387 = vmul.f32 %v367, %v383
    %v388 = vmul.f32 %v367, %v384
    %v389 = vmul.f32 %v371, %v381
    %v390 = vmul.f32 %v371, %v382
    %v391 = vmul.f32 %v371, %v383
    %v392 = vmul.f32 %v371, %v384
    %v393 = vmul.f32 %v375, %v381
    %v394 = vmul.f32 %v375, %v382
    %v395 = vmul.f32 %v375, %v383
    %v396 = vmul.f32 %v375, %v384
    %v397 = vmul.f32 %v379, %v381
    %v398 = vmul.f32 %v379, %v382
    %v399 = vmul.f32 %v379, %v383
    %v400 = vmul.f32 %v379, %v384
    %v401 = vadd.f32 %v349, %v385
    %v402 = vadd.f32 %v350, %v386
    %v403 = vadd.f32 %v351, %v387
    %v404 = vadd.f32 %v352, %v388
    %v405 = vadd.f32 %v353, %v389
    %v406 = vadd.f32 %v354, %v390
    %v407 = vadd.f32 %v355, %v391
    %v408 = vadd.f32 %v356, %v392
    %v409 = vadd.f32 %v357, %v393
    %v410 = vadd.f32 %v358, %v394
    %v411 = vadd.f32 %v359, %v395
    %v412 = vadd.f32 %v360, %v396
    %v413 = vadd.f32 %v361, %v397
    %v414 = vadd.f32 %v362, %v398
    %v415 = vadd.f32 %v363, %v399
    %v416 = vadd.f32 %v364, %v400
    %417 = vset.pattern.permute.xlu0 5
    %418 = vperm.xlu0 %417, %v125
    %v419 = vpop.permute.xlu0 %418
    %421 = vset.pattern.permute.xlu0 5
    %422 = vperm.xlu0 %421, %v126
    %v423 = vpop.permute.xlu0 %422
    %425 = vset.pattern.permute.xlu0 5
    %426 = vperm.xlu0 %425, %v127
    %v427 = vpop.permute.xlu0 %426
    %429 = vset.pattern.permute.xlu0 5
    %430 = vperm.xlu0 %429, %v128
    %v431 = vpop.permute.xlu0 %430
    %v433 = vperm.slane %v117, 5
    %v434 = vperm.slane %v118, 5
    %v435 = vperm.slane %v119, 5
    %v436 = vperm.slane %v120, 5
    %v437 = vmul.f32 %v419, %v433
    %v438 = vmul.f32 %v419, %v434
    %v439 = vmul.f32 %v419, %v435
    %v440 = vmul.f32 %v419, %v436
    %v441 = vmul.f32 %v423, %v433
    %v442 = vmul.f32 %v423, %v434
    %v443 = vmul.f32 %v423, %v435
    %v444 = vmul.f32 %v423, %v436
    %v445 = vmul.f32 %v427, %v433
    %v446 = vmul.f32 %v427, %v434
    %v447 = vmul.f32 %v427, %v435
    %v448 = vmul.f32 %v427, %v436
    %v449 = vmul.f32 %v431, %v433
    %v450 = vmul.f32 %v431, %v434
    %v451 = vmul.f32 %v431, %v435
    %v452 = vmul.f32 %v431, %v436
    %v453 = vadd.f32 %v401, %v437
    %v454 = vadd.f32 %v402, %v438
    %v455 = vadd.f32 %v403, %v439
    %v456 = vadd.f32 %v404, %v440
    %v457 = vadd.f32 %v405, %v441
    %v458 = vadd.f32 %v406, %v442
    %v459 = vadd.f32 %v407, %v443
    %v460 = vadd.f32 %v408, %v444
    %v461 = vadd.f32 %v409, %v445
    %v462 = vadd.f32 %v410, %v446
    %v463 = vadd.f32 %v411, %v447
    %v464 = vadd.f32 %v412, %v448
    %v465 = vadd.f32 %v413, %v449
    %v466 = vadd.f32 %v414, %v450
    %v467 = vadd.f32 %v415, %v451
    %v468 = vadd.f32 %v416, %v452
    %469 = vset.pattern.permute.xlu0 6
    %470 = vperm.xlu0 %469, %v125
    %v471 = vpop.permute.xlu0 %470
    %473 = vset.pattern.permute.xlu0 6
    %474 = vperm.xlu0 %473, %v126
    %v475 = vpop.permute.xlu0 %474
    %477 = vset.pattern.permute.xlu0 6
    %478 = vperm.xlu0 %477, %v127
    %v479 = vpop.permute.xlu0 %478
    %481 = vset.pattern.permute.xlu0 6
    %482 = vperm.xlu0 %481, %v128
    %v483 = vpop.permute.xlu0 %482
    %v485 = vperm.slane %v117, 6
    %v486 = vperm.slane %v118, 6
    %v487 = vperm.slane %v119, 6
    %v488 = vperm.slane %v120, 6
    %v489 = vmul.f32 %v471, %v485
    %v490 = vmul.f32 %v471, %v486
    %v491 = vmul.f32 %v471, %v487
    %v492 = vmul.f32 %v471, %v488
    %v493 = vmul.f32 %v475, %v485
    %v494 = vmul.f32 %v475, %v486
    %v495 = vmul.f32 %v475, %v487
    %v496 = vmul.f32 %v475, %v488
    %v497 = vmul.f32 %v479, %v485
    %v498 = vmul.f32 %v479, %v486
    %v499 = vmul.f32 %v479, %v487
    %v500 = vmul.f32 %v479, %v488
    %v501 = vmul.f32 %v483, %v485
    %v502 = vmul.f32 %v483, %v486
    %v503 = vmul.f32 %v483, %v487
    %v504 = vmul.f32 %v483, %v488
    %v505 = vadd.f32 %v453, %v489
    %v506 = vadd.f32 %v454, %v490
    %v507 = vadd.f32 %v455, %v491
    %v508 = vadd.f32 %v456, %v492
    %v509 = vadd.f32 %v457, %v493
    %v510 = vadd.f32 %v458, %v494
    %v511 = vadd.f32 %v459, %v495
    %v512 = vadd.f32 %v460, %v496
    %v513 = vadd.f32 %v461, %v497
    %v514 = vadd.f32 %v462, %v498
    %v515 = vadd.f32 %v463, %v499
    %v516 = vadd.f32 %v464, %v500
    %v517 = vadd.f32 %v465, %v501
    %v518 = vadd.f32 %v466, %v502
    %v519 = vadd.f32 %v467, %v503
    %v520 = vadd.f32 %v468, %v504
    %521 = vset.pattern.permute.xlu0 7
    %522 = vperm.xlu0 %521, %v125
    %v523 = vpop.permute.xlu0 %522
    %525 = vset.pattern.permute.xlu0 7
    %526 = vperm.xlu0 %525, %v126
    %v527 = vpop.permute.xlu0 %526
    %529 = vset.pattern.permute.xlu0 7
    %530 = vperm.xlu0 %529, %v127
    %v531 = vpop.permute.xlu0 %530
    %533 = vset.pattern.permute.xlu0 7
    %534 = vperm.xlu0 %533, %v128
    %v535 = vpop.permute.xlu0 %534
    %v537 = vperm.slane %v117, 7
    %v538 = vperm.slane %v118, 7
    %v539 = vperm.slane %v119, 7
    %v540 = vperm.slane %v120, 7
    %v541 = vmul.f32 %v523, %v537
    %v542 = vmul.f32 %v523, %v538
    %v543 = vmul.f32 %v523, %v539
    %v544 = vmul.f32 %v523, %v540
    %v545 = vmul.f32 %v527, %v537
    %v546 = vmul.f32 %v527, %v538
    %v547 = vmul.f32 %v527, %v539
    %v548 = vmul.f32 %v527, %v540
    %v549 = vmul.f32 %v531, %v537
    %v550 = vmul.f32 %v531, %v538
    %v551 = vmul.f32 %v531, %v539
    %v552 = vmul.f32 %v531, %v540
    %v553 = vmul.f32 %v535, %v537
    %v554 = vmul.f32 %v535, %v538
    %v555 = vmul.f32 %v535, %v539
    %v556 = vmul.f32 %v535, %v540
    %v557 = vadd.f32 %v505, %v541
    %v558 = vadd.f32 %v506, %v542
    %v559 = vadd.f32 %v507, %v543
    %v560 = vadd.f32 %v508, %v544
    %v561 = vadd.f32 %v509, %v545
    %v562 = vadd.f32 %v510, %v546
    %v563 = vadd.f32 %v511, %v547
    %v564 = vadd.f32 %v512, %v548
    %v565 = vadd.f32 %v513, %v549
    %v566 = vadd.f32 %v514, %v550
    %v567 = vadd.f32 %v515, %v551
    %v568 = vadd.f32 %v516, %v552
    %v569 = vadd.f32 %v517, %v553
    %v570 = vadd.f32 %v518, %v554
    %v571 = vadd.f32 %v519, %v555
    %v572 = vadd.f32 %v520, %v556
    %573 = vset.pattern.permute.xlu0 8
    %574 = vperm.xlu0 %573, %v125
    %v575 = vpop.permute.xlu0 %574
    %577 = vset.pattern.permute.xlu0 8
    %578 = vperm.xlu0 %577, %v126
    %v579 = vpop.permute.xlu0 %578
    %581 = vset.pattern.permute.xlu0 8
    %582 = vperm.xlu0 %581, %v127
    %v583 = vpop.permute.xlu0 %582
    %585 = vset.pattern.permute.xlu0 8
    %586 = vperm.xlu0 %585, %v128
    %v587 = vpop.permute.xlu0 %586
    %v589 = vperm.slane %v121, 0
    %v590 = vperm.slane %v122, 0
    %v591 = vperm.slane %v123, 0
    %v592 = vperm.slane %v124, 0
    %v593 = vmul.f32 %v575, %v589
    %v594 = vmul.f32 %v575, %v590
    %v595 = vmul.f32 %v575, %v591
    %v596 = vmul.f32 %v575, %v592
    %v597 = vmul.f32 %v579, %v589
    %v598 = vmul.f32 %v579, %v590
    %v599 = vmul.f32 %v579, %v591
    %v600 = vmul.f32 %v579, %v592
    %v601 = vmul.f32 %v583, %v589
    %v602 = vmul.f32 %v583, %v590
    %v603 = vmul.f32 %v583, %v591
    %v604 = vmul.f32 %v583, %v592
    %v605 = vmul.f32 %v587, %v589
    %v606 = vmul.f32 %v587, %v590
    %v607 = vmul.f32 %v587, %v591
    %v608 = vmul.f32 %v587, %v592
    %v609 = vadd.f32 %v557, %v593
    %v610 = vadd.f32 %v558, %v594
    %v611 = vadd.f32 %v559, %v595
    %v612 = vadd.f32 %v560, %v596
    %v613 = vadd.f32 %v561, %v597
    %v614 = vadd.f32 %v562, %v598
    %v615 = vadd.f32 %v563, %v599
    %v616 = vadd.f32 %v564, %v600
    %v617 = vadd.f32 %v565, %v601
    %v618 = vadd.f32 %v566, %v602
    %v619 = vadd.f32 %v567, %v603
    %v620 = vadd.f32 %v568, %v604
    %v621 = vadd.f32 %v569, %v605
    %v622 = vadd.f32 %v570, %v606
    %v623 = vadd.f32 %v571, %v607
    %v624 = vadd.f32 %v572, %v608
    %625 = vset.pattern.permute.xlu0 9
    %626 = vperm.xlu0 %625, %v125
    %v627 = vpop.permute.xlu0 %626
    %629 = vset.pattern.permute.xlu0 9
    %630 = vperm.xlu0 %629, %v126
    %v631 = vpop.permute.xlu0 %630
    %633 = vset.pattern.permute.xlu0 9
    %634 = vperm.xlu0 %633, %v127
    %v635 = vpop.permute.xlu0 %634
    %637 = vset.pattern.permute.xlu0 9
    %638 = vperm.xlu0 %637, %v128
    %v639 = vpop.permute.xlu0 %638
    %v641 = vperm.slane %v121, 1
    %v642 = vperm.slane %v122, 1
    %v643 = vperm.slane %v123, 1
    %v644 = vperm.slane %v124, 1
    %v645 = vmul.f32 %v627, %v641
    %v646 = vmul.f32 %v627, %v642
    %v647 = vmul.f32 %v627, %v643
    %v648 = vmul.f32 %v627, %v644
    %v649 = vmul.f32 %v631, %v641
    %v650 = vmul.f32 %v631, %v642
    %v651 = vmul.f32 %v631, %v643
    %v652 = vmul.f32 %v631, %v644
    %v653 = vmul.f32 %v635, %v641
    %v654 = vmul.f32 %v635, %v642
    %v655 = vmul.f32 %v635, %v643
    %v656 = vmul.f32 %v635, %v644
    %v657 = vmul.f32 %v639, %v641
    %v658 = vmul.f32 %v639, %v642
    %v659 = vmul.f32 %v639, %v643
    %v660 = vmul.f32 %v639, %v644
    %v661 = vadd.f32 %v609, %v645
    %v662 = vadd.f32 %v610, %v646
    %v663 = vadd.f32 %v611, %v647
    %v664 = vadd.f32 %v612, %v648
    %v665 = vadd.f32 %v613, %v649
    %v666 = vadd.f32 %v614, %v650
    %v667 = vadd.f32 %v615, %v651
    %v668 = vadd.f32 %v616, %v652
    %v669 = vadd.f32 %v617, %v653
    %v670 = vadd.f32 %v618, %v654
    %v671 = vadd.f32 %v619, %v655
    %v672 = vadd.f32 %v620, %v656
    %v673 = vadd.f32 %v621, %v657
    %v674 = vadd.f32 %v622, %v658
    %v675 = vadd.f32 %v623, %v659
    %v676 = vadd.f32 %v624, %v660
    %677 = vset.pattern.permute.xlu0 10
    %678 = vperm.xlu0 %677, %v125
    %v679 = vpop.permute.xlu0 %678
    %681 = vset.pattern.permute.xlu0 10
    %682 = vperm.xlu0 %681, %v126
    %v683 = vpop.permute.xlu0 %682
    %685 = vset.pattern.permute.xlu0 10
    %686 = vperm.xlu0 %685, %v127
    %v687 = vpop.permute.xlu0 %686
    %689 = vset.pattern.permute.xlu0 10
    %690 = vperm.xlu0 %689, %v128
    %v691 = vpop.permute.xlu0 %690
    %v693 = vperm.slane %v121, 2
    %v694 = vperm.slane %v122, 2
    %v695 = vperm.slane %v123, 2
    %v696 = vperm.slane %v124, 2
    %v697 = vmul.f32 %v679, %v693
    %v698 = vmul.f32 %v679, %v694
    %v699 = vmul.f32 %v679, %v695
    %v700 = vmul.f32 %v679, %v696
    %v701 = vmul.f32 %v683, %v693
    %v702 = vmul.f32 %v683, %v694
    %v703 = vmul.f32 %v683, %v695
    %v704 = vmul.f32 %v683, %v696
    %v705 = vmul.f32 %v687, %v693
    %v706 = vmul.f32 %v687, %v694
    %v707 = vmul.f32 %v687, %v695
    %v708 = vmul.f32 %v687, %v696
    %v709 = vmul.f32 %v691, %v693
    %v710 = vmul.f32 %v691, %v694
    %v711 = vmul.f32 %v691, %v695
    %v712 = vmul.f32 %v691, %v696
    %v713 = vadd.f32 %v661, %v697
    %v714 = vadd.f32 %v662, %v698
    %v715 = vadd.f32 %v663, %v699
    %v716 = vadd.f32 %v664, %v700
    %v717 = vadd.f32 %v665, %v701
    %v718 = vadd.f32 %v666, %v702
    %v719 = vadd.f32 %v667, %v703
    %v720 = vadd.f32 %v668, %v704
    %v721 = vadd.f32 %v669, %v705
    %v722 = vadd.f32 %v670, %v706
    %v723 = vadd.f32 %v671, %v707
    %v724 = vadd.f32 %v672, %v708
    %v725 = vadd.f32 %v673, %v709
    %v726 = vadd.f32 %v674, %v710
    %v727 = vadd.f32 %v675, %v711
    %v728 = vadd.f32 %v676, %v712
    %729 = vset.pattern.permute.xlu0 11
    %730 = vperm.xlu0 %729, %v125
    %v731 = vpop.permute.xlu0 %730
    %733 = vset.pattern.permute.xlu0 11
    %734 = vperm.xlu0 %733, %v126
    %v735 = vpop.permute.xlu0 %734
    %737 = vset.pattern.permute.xlu0 11
    %738 = vperm.xlu0 %737, %v127
    %v739 = vpop.permute.xlu0 %738
    %741 = vset.pattern.permute.xlu0 11
    %742 = vperm.xlu0 %741, %v128
    %v743 = vpop.permute.xlu0 %742
    %v745 = vperm.slane %v121, 3
    %v746 = vperm.slane %v122, 3
    %v747 = vperm.slane %v123, 3
    %v748 = vperm.slane %v124, 3
    %v749 = vmul.f32 %v731, %v745
    %v750 = vmul.f32 %v731, %v746
    %v751 = vmul.f32 %v731, %v747
    %v752 = vmul.f32 %v731, %v748
    %v753 = vmul.f32 %v735, %v745
    %v754 = vmul.f32 %v735, %v746
    %v755 = vmul.f32 %v735, %v747
    %v756 = vmul.f32 %v735, %v748
    %v757 = vmul.f32 %v739, %v745
    %v758 = vmul.f32 %v739, %v746
    %v759 = vmul.f32 %v739, %v747
    %v760 = vmul.f32 %v739, %v748
    %v761 = vmul.f32 %v743, %v745
    %v762 = vmul.f32 %v743, %v746
    %v763 = vmul.f32 %v743, %v747
    %v764 = vmul.f32 %v743, %v748
    %v765 = vadd.f32 %v713, %v749
    %v766 = vadd.f32 %v714, %v750
    %v767 = vadd.f32 %v715, %v751
    %v768 = vadd.f32 %v716, %v752
    %v769 = vadd.f32 %v717, %v753
    %v770 = vadd.f32 %v718, %v754
    %v771 = vadd.f32 %v719, %v755
    %v772 = vadd.f32 %v720, %v756
    %v773 = vadd.f32 %v721, %v757
    %v774 = vadd.f32 %v722, %v758
    %v775 = vadd.f32 %v723, %v759
    %v776 = vadd.f32 %v724, %v760
    %v777 = vadd.f32 %v725, %v761
    %v778 = vadd.f32 %v726, %v762
    %v779 = vadd.f32 %v727, %v763
    %v780 = vadd.f32 %v728, %v764
    %781 = vset.pattern.permute.xlu0 12
    %782 = vperm.xlu0 %781, %v125
    %v783 = vpop.permute.xlu0 %782
    %785 = vset.pattern.permute.xlu0 12
    %786 = vperm.xlu0 %785, %v126
    %v787 = vpop.permute.xlu0 %786
    %789 = vset.pattern.permute.xlu0 12
    %790 = vperm.xlu0 %789, %v127
    %v791 = vpop.permute.xlu0 %790
    %793 = vset.pattern.permute.xlu0 12
    %794 = vperm.xlu0 %793, %v128
    %v795 = vpop.permute.xlu0 %794
    %v797 = vperm.slane %v121, 4
    %v798 = vperm.slane %v122, 4
    %v799 = vperm.slane %v123, 4
    %v800 = vperm.slane %v124, 4
    %v801 = vmul.f32 %v783, %v797
    %v802 = vmul.f32 %v783, %v798
    %v803 = vmul.f32 %v783, %v799
    %v804 = vmul.f32 %v783, %v800
    %v805 = vmul.f32 %v787, %v797
    %v806 = vmul.f32 %v787, %v798
    %v807 = vmul.f32 %v787, %v799
    %v808 = vmul.f32 %v787, %v800
    %v809 = vmul.f32 %v791, %v797
    %v810 = vmul.f32 %v791, %v798
    %v811 = vmul.f32 %v791, %v799
    %v812 = vmul.f32 %v791, %v800
    %v813 = vmul.f32 %v795, %v797
    %v814 = vmul.f32 %v795, %v798
    %v815 = vmul.f32 %v795, %v799
    %v816 = vmul.f32 %v795, %v800
    %v817 = vadd.f32 %v765, %v801
    %v818 = vadd.f32 %v766, %v802
    %v819 = vadd.f32 %v767, %v803
    %v820 = vadd.f32 %v768, %v804
    %v821 = vadd.f32 %v769, %v805
    %v822 = vadd.f32 %v770, %v806
    %v823 = vadd.f32 %v771, %v807
    %v824 = vadd.f32 %v772, %v808
    %v825 = vadd.f32 %v773, %v809
    %v826 = vadd.f32 %v774, %v810
    %v827 = vadd.f32 %v775, %v811
    %v828 = vadd.f32 %v776, %v812
    %v829 = vadd.f32 %v777, %v813
    %v830 = vadd.f32 %v778, %v814
    %v831 = vadd.f32 %v779, %v815
    %v832 = vadd.f32 %v780, %v816
    %833 = vset.pattern.permute.xlu0 13
    %834 = vperm.xlu0 %833, %v125
    %v835 = vpop.permute.xlu0 %834
    %837 = vset.pattern.permute.xlu0 13
    %838 = vperm.xlu0 %837, %v126
    %v839 = vpop.permute.xlu0 %838
    %841 = vset.pattern.permute.xlu0 13
    %842 = vperm.xlu0 %841, %v127
    %v843 = vpop.permute.xlu0 %842
    %845 = vset.pattern.permute.xlu0 13
    %846 = vperm.xlu0 %845, %v128
    %v847 = vpop.permute.xlu0 %846
    %v849 = vperm.slane %v121, 5
    %v850 = vperm.slane %v122, 5
    %v851 = vperm.slane %v123, 5
    %v852 = vperm.slane %v124, 5
    %v853 = vmul.f32 %v835, %v849
    %v854 = vmul.f32 %v835, %v850
    %v855 = vmul.f32 %v835, %v851
    %v856 = vmul.f32 %v835, %v852
    %v857 = vmul.f32 %v839, %v849
    %v858 = vmul.f32 %v839, %v850
    %v859 = vmul.f32 %v839, %v851
    %v860 = vmul.f32 %v839, %v852
    %v861 = vmul.f32 %v843, %v849
    %v862 = vmul.f32 %v843, %v850
    %v863 = vmul.f32 %v843, %v851
    %v864 = vmul.f32 %v843, %v852
    %v865 = vmul.f32 %v847, %v849
    %v866 = vmul.f32 %v847, %v850
    %v867 = vmul.f32 %v847, %v851
    %v868 = vmul.f32 %v847, %v852
    %v869 = vadd.f32 %v817, %v853
    %v870 = vadd.f32 %v818, %v854
    %v871 = vadd.f32 %v819, %v855
    %v872 = vadd.f32 %v820, %v856
    %v873 = vadd.f32 %v821, %v857
    %v874 = vadd.f32 %v822, %v858
    %v875 = vadd.f32 %v823, %v859
    %v876 = vadd.f32 %v824, %v860
    %v877 = vadd.f32 %v825, %v861
    %v878 = vadd.f32 %v826, %v862
    %v879 = vadd.f32 %v827, %v863
    %v880 = vadd.f32 %v828, %v864
    %v881 = vadd.f32 %v829, %v865
    %v882 = vadd.f32 %v830, %v866
    %v883 = vadd.f32 %v831, %v867
    %v884 = vadd.f32 %v832, %v868
    %885 = vset.pattern.permute.xlu0 14
    %886 = vperm.xlu0 %885, %v125
    %v887 = vpop.permute.xlu0 %886
    %889 = vset.pattern.permute.xlu0 14
    %890 = vperm.xlu0 %889, %v126
    %v891 = vpop.permute.xlu0 %890
    %893 = vset.pattern.permute.xlu0 14
    %894 = vperm.xlu0 %893, %v127
    %v895 = vpop.permute.xlu0 %894
    %897 = vset.pattern.permute.xlu0 14
    %898 = vperm.xlu0 %897, %v128
    %v899 = vpop.permute.xlu0 %898
    %v901 = vperm.slane %v121, 6
    %v902 = vperm.slane %v122, 6
    %v903 = vperm.slane %v123, 6
    %v904 = vperm.slane %v124, 6
    %v905 = vmul.f32 %v887, %v901
    %v906 = vmul.f32 %v887, %v902
    %v907 = vmul.f32 %v887, %v903
    %v908 = vmul.f32 %v887, %v904
    %v909 = vmul.f32 %v891, %v901
    %v910 = vmul.f32 %v891, %v902
    %v911 = vmul.f32 %v891, %v903
    %v912 = vmul.f32 %v891, %v904
    %v913 = vmul.f32 %v895, %v901
    %v914 = vmul.f32 %v895, %v902
    %v915 = vmul.f32 %v895, %v903
    %v916 = vmul.f32 %v895, %v904
    %v917 = vmul.f32 %v899, %v901
    %v918 = vmul.f32 %v899, %v902
    %v919 = vmul.f32 %v899, %v903
    %v920 = vmul.f32 %v899, %v904
    %v921 = vadd.f32 %v869, %v905
    %v922 = vadd.f32 %v870, %v906
    %v923 = vadd.f32 %v871, %v907
    %v924 = vadd.f32 %v872, %v908
    %v925 = vadd.f32 %v873, %v909
    %v926 = vadd.f32 %v874, %v910
    %v927 = vadd.f32 %v875, %v911
    %v928 = vadd.f32 %v876, %v912
    %v929 = vadd.f32 %v877, %v913
    %v930 = vadd.f32 %v878, %v914
    %v931 = vadd.f32 %v879, %v915
    %v932 = vadd.f32 %v880, %v916
    %v933 = vadd.f32 %v881, %v917
    %v934 = vadd.f32 %v882, %v918
    %v935 = vadd.f32 %v883, %v919
    %v936 = vadd.f32 %v884, %v920
    %937 = vset.pattern.permute.xlu0 15
    %938 = vperm.xlu0 %937, %v125
    %v939 = vpop.permute.xlu0 %938
    %941 = vset.pattern.permute.xlu0 15
    %942 = vperm.xlu0 %941, %v126
    %v943 = vpop.permute.xlu0 %942
    %945 = vset.pattern.permute.xlu0 15
    %946 = vperm.xlu0 %945, %v127
    %v947 = vpop.permute.xlu0 %946
    %949 = vset.pattern.permute.xlu0 15
    %950 = vperm.xlu0 %949, %v128
    %v951 = vpop.permute.xlu0 %950
    %v953 = vperm.slane %v121, 7
    %v954 = vperm.slane %v122, 7
    %v955 = vperm.slane %v123, 7
    %v956 = vperm.slane %v124, 7
    %v957 = vmul.f32 %v939, %v953
    %v958 = vmul.f32 %v939, %v954
    %v959 = vmul.f32 %v939, %v955
    %v960 = vmul.f32 %v939, %v956
    %v961 = vmul.f32 %v943, %v953
    %v962 = vmul.f32 %v943, %v954
    %v963 = vmul.f32 %v943, %v955
    %v964 = vmul.f32 %v943, %v956
    %v965 = vmul.f32 %v947, %v953
    %v966 = vmul.f32 %v947, %v954
    %v967 = vmul.f32 %v947, %v955
    %v968 = vmul.f32 %v947, %v956
    %v969 = vmul.f32 %v951, %v953
    %v970 = vmul.f32 %v951, %v954
    %v971 = vmul.f32 %v951, %v955
    %v972 = vmul.f32 %v951, %v956
    %v973 = vadd.f32 %v921, %v957
    %v974 = vadd.f32 %v922, %v958
    %v975 = vadd.f32 %v923, %v959
    %v976 = vadd.f32 %v924, %v960
    %v977 = vadd.f32 %v925, %v961
    %v978 = vadd.f32 %v926, %v962
    %v979 = vadd.f32 %v927, %v963
    %v980 = vadd.f32 %v928, %v964
    %v981 = vadd.f32 %v929, %v965
    %v982 = vadd.f32 %v930, %v966
    %v983 = vadd.f32 %v931, %v967
    %v984 = vadd.f32 %v932, %v968
    %v985 = vadd.f32 %v933, %v969
    %v986 = vadd.f32 %v934, %v970
    %v987 = vadd.f32 %v935, %v971
    %v988 = vadd.f32 %v936, %v972
    %v989 = vmax.f32 %v973, 0.0
    %v990 = vmax.f32 %v974, 0.0
    %v991 = vmax.f32 %v975, 0.0
    %v992 = vmax.f32 %v976, 0.0
    %v993 = vmax.f32 %v977, 0.0
    %v994 = vmax.f32 %v978, 0.0
    %v995 = vmax.f32 %v979, 0.0
    %v996 = vmax.f32 %v980, 0.0
    %v997 = vmax.f32 %v981, 0.0
    %v998 = vmax.f32 %v982, 0.0
    %v999 = vmax.f32 %v983, 0.0
    %v1000 = vmax.f32 %v984, 0.0
    %v1001 = vmax.f32 %v985, 0.0
    %v1002 = vmax.f32 %v986, 0.0
    %v1003 = vmax.f32 %v987, 0.0
    %v1004 = vmax.f32 %v988, 0.0
    %v1005 = vld [vmem:[%s5] sm:$0x3]
    %v1006 = vld [vmem:[%s6] sm:$0x3]
    %1008 = vset.pattern.permute.xlu0 0
    %1009 = vperm.xlu0 %1008, %v1005
    %v1010 = vpop.permute.xlu0 %1009
    %v1012 = vperm.slane %v989, 0
    %v1013 = vperm.slane %v990, 0
    %v1014 = vperm.slane %v991, 0
    %v1015 = vperm.slane %v992, 0
    %v1016 = vmul.f32 %v1010, %v1012
    %v1017 = vmul.f32 %v1010, %v1013
    %v1018 = vmul.f32 %v1010, %v1014
    %v1019 = vmul.f32 %v1010, %v1015
    %1021 = vset.pattern.permute.xlu0 0
    %1022 = vperm.xlu0 %1021, %v1006
    %v1023 = vpop.permute.xlu0 %1022
    %v1025 = vadd.f32 %v1023, %v1016
    %v1026 = vadd.f32 %v1023, %v1017
    %v1027 = vadd.f32 %v1023, %v1018
    %v1028 = vadd.f32 %v1023, %v1019
    %1029 = vset.pattern.permute.xlu0 1
    %1030 = vperm.xlu0 %1029, %v1005
    %v1031 = vpop.permute.xlu0 %1030
    %v1033 = vperm.slane %v989, 1
    %v1034 = vperm.slane %v990, 1
    %v1035 = vperm.slane %v991, 1
    %v1036 = vperm.slane %v992, 1
    %v1037 = vmul.f32 %v1031, %v1033
    %v1038 = vmul.f32 %v1031, %v1034
    %v1039 = vmul.f32 %v1031, %v1035
    %v1040 = vmul.f32 %v1031, %v1036
    %v1041 = vadd.f32 %v1025, %v1037
    %v1042 = vadd.f32 %v1026, %v1038
    %v1043 = vadd.f32 %v1027, %v1039
    %v1044 = vadd.f32 %v1028, %v1040
    %1045 = vset.pattern.permute.xlu0 2
    %1046 = vperm.xlu0 %1045, %v1005
    %v1047 = vpop.permute.xlu0 %1046
    %v1049 = vperm.slane %v989, 2
    %v1050 = vperm.slane %v990, 2
    %v1051 = vperm.slane %v991, 2
    %v1052 = vperm.slane %v992, 2
    %v1053 = vmul.f32 %v1047, %v1049
    %v1054 = vmul.f32 %v1047, %v1050
    %v1055 = vmul.f32 %v1047, %v1051
    %v1056 = vmul.f32 %v1047, %v1052
    %v1057 = vadd.f32 %v1041, %v1053
    %v1058 = vadd.f32 %v1042, %v1054
    %v1059 = vadd.f32 %v1043, %v1055
    %v1060 = vadd.f32 %v1044, %v1056
    %1061 = vset.pattern.permute.xlu0 3
    %1062 = vperm.xlu0 %1061, %v1005
    %v1063 = vpop.permute.xlu0 %1062
    %v1065 = vperm.slane %v989, 3
    %v1066 = vperm.slane %v990, 3
    %v1067 = vperm.slane %v991, 3
    %v1068 = vperm.slane %v992, 3
    %v1069 = vmul.f32 %v1063, %v1065
    %v1070 = vmul.f32 %v1063, %v1066
    %v1071 = vmul.f32 %v1063, %v1067
    %v1072 = vmul.f32 %v1063, %v1068
    %v1073 = vadd.f32 %v1057, %v1069
    %v1074 = vadd.f32 %v1058, %v1070
    %v1075 = vadd.f32 %v1059, %v1071
    %v1076 = vadd.f32 %v1060, %v1072
    %1077 = vset.pattern.permute.xlu0 4
    %1078 = vperm.xlu0 %1077, %v1005
    %v1079 = vpop.permute.xlu0 %1078
    %v1081 = vperm.slane %v989, 4
    %v1082 = vperm.slane %v990, 4
    %v1083 = vperm.slane %v991, 4
    %v1084 = vperm.slane %v992, 4
    %v1085 = vmul.f32 %v1079, %v1081
    %v1086 = vmul.f32 %v1079, %v1082
    %v1087 = vmul.f32 %v1079, %v1083
    %v1088 = vmul.f32 %v1079, %v1084
    %v1089 = vadd.f32 %v1073, %v1085
    %v1090 = vadd.f32 %v1074, %v1086
    %v1091 = vadd.f32 %v1075, %v1087
    %v1092 = vadd.f32 %v1076, %v1088
    %1093 = vset.pattern.permute.xlu0 5
    %1094 = vperm.xlu0 %1093, %v1005
    %v1095 = vpop.permute.xlu0 %1094
    %v1097 = vperm.slane %v989, 5
    %v1098 = vperm.slane %v990, 5
    %v1099 = vperm.slane %v991, 5
    %v1100 = vperm.slane %v992, 5
    %v1101 = vmul.f32 %v1095, %v1097
    %v1102 = vmul.f32 %v1095, %v1098
    %v1103 = vmul.f32 %v1095, %v1099
    %v1104 = vmul.f32 %v1095, %v1100
    %v1105 = vadd.f32 %v1089, %v1101
    %v1106 = vadd.f32 %v1090, %v1102
    %v1107 = vadd.f32 %v1091, %v1103
    %v1108 = vadd.f32 %v1092, %v1104
    %1109 = vset.pattern.permute.xlu0 6
    %1110 = vperm.xlu0 %1109, %v1005
    %v1111 = vpop.permute.xlu0 %1110
    %v1113 = vperm.slane %v989, 6
    %v1114 = vperm.slane %v990, 6
    %v1115 = vperm.slane %v991, 6
    %v1116 = vperm.slane %v992, 6
    %v1117 = vmul.f32 %v1111, %v1113
    %v1118 = vmul.f32 %v1111, %v1114
    %v1119 = vmul.f32 %v1111, %v1115
    %v1120 = vmul.f32 %v1111, %v1116
    %v1121 = vadd.f32 %v1105, %v1117
    %v1122 = vadd.f32 %v1106, %v1118
    %v1123 = vadd.f32 %v1107, %v1119
    %v1124 = vadd.f32 %v1108, %v1120
    %1125 = vset.pattern.permute.xlu0 7
    %1126 = vperm.xlu0 %1125, %v1005
    %v1127 = vpop.permute.xlu0 %1126
    %v1129 = vperm.slane %v989, 7
    %v1130 = vperm.slane %v990, 7
    %v1131 = vperm.slane %v991, 7
    %v1132 = vperm.slane %v992, 7
    %v1133 = vmul.f32 %v1127, %v1129
    %v1134 = vmul.f32 %v1127, %v1130
    %v1135 = vmul.f32 %v1127, %v1131
    %v1136 = vmul.f32 %v1127, %v1132
    %v1137 = vadd.f32 %v1121, %v1133
    %v1138 = vadd.f32 %v1122, %v1134
    %v1139 = vadd.f32 %v1123, %v1135
    %v1140 = vadd.f32 %v1124, %v1136
    %1141 = vset.pattern.permute.xlu0 8
    %1142 = vperm.xlu0 %1141, %v1005
    %v1143 = vpop.permute.xlu0 %1142
    %v1145 = vperm.slane %v993, 0
    %v1146 = vperm.slane %v994, 0
    %v1147 = vperm.slane %v995, 0
    %v1148 = vperm.slane %v996, 0
    %v1149 = vmul.f32 %v1143, %v1145
    %v1150 = vmul.f32 %v1143, %v1146
    %v1151 = vmul.f32 %v1143, %v1147
    %v1152 = vmul.f32 %v1143, %v1148
    %v1153 = vadd.f32 %v1137, %v1149
    %v1154 = vadd.f32 %v1138, %v1150
    %v1155 = vadd.f32 %v1139, %v1151
    %v1156 = vadd.f32 %v1140, %v1152
    %1157 = vset.pattern.permute.xlu0 9
    %1158 = vperm.xlu0 %1157, %v1005
    %v1159 = vpop.permute.xlu0 %1158
    %v1161 = vperm.slane %v993, 1
    %v1162 = vperm.slane %v994, 1
    %v1163 = vperm.slane %v995, 1
    %v1164 = vperm.slane %v996, 1
    %v1165 = vmul.f32 %v1159, %v1161
    %v1166 = vmul.f32 %v1159, %v1162
    %v1167 = vmul.f32 %v1159, %v1163
    %v1168 = vmul.f32 %v1159, %v1164
    %v1169 = vadd.f32 %v1153, %v1165
    %v1170 = vadd.f32 %v1154, %v1166
    %v1171 = vadd.f32 %v1155, %v1167
    %v1172 = vadd.f32 %v1156, %v1168
    %1173 = vset.pattern.permute.xlu0 10
    %1174 = vperm.xlu0 %1173, %v1005
    %v1175 = vpop.permute.xlu0 %1174
    %v1177 = vperm.slane %v993, 2
    %v1178 = vperm.slane %v994, 2
    %v1179 = vperm.slane %v995, 2
    %v1180 = vperm.slane %v996, 2
    %v1181 = vmul.f32 %v1175, %v1177
    %v1182 = vmul.f32 %v1175, %v1178
    %v1183 = vmul.f32 %v1175, %v1179
    %v1184 = vmul.f32 %v1175, %v1180
    %v1185 = vadd.f32 %v1169, %v1181
    %v1186 = vadd.f32 %v1170, %v1182
    %v1187 = vadd.f32 %v1171, %v1183
    %v1188 = vadd.f32 %v1172, %v1184
    %1189 = vset.pattern.permute.xlu0 11
    %1190 = vperm.xlu0 %1189, %v1005
    %v1191 = vpop.permute.xlu0 %1190
    %v1193 = vperm.slane %v993, 3
    %v1194 = vperm.slane %v994, 3
    %v1195 = vperm.slane %v995, 3
    %v1196 = vperm.slane %v996, 3
    %v1197 = vmul.f32 %v1191, %v1193
    %v1198 = vmul.f32 %v1191, %v1194
    %v1199 = vmul.f32 %v1191, %v1195
    %v1200 = vmul.f32 %v1191, %v1196
    %v1201 = vadd.f32 %v1185, %v1197
    %v1202 = vadd.f32 %v1186, %v1198
    %v1203 = vadd.f32 %v1187, %v1199
    %v1204 = vadd.f32 %v1188, %v1200
    %1205 = vset.pattern.permute.xlu0 12
    %1206 = vperm.xlu0 %1205, %v1005
    %v1207 = vpop.permute.xlu0 %1206
    %v1209 = vperm.slane %v993, 4
    %v1210 = vperm.slane %v994, 4
    %v1211 = vperm.slane %v995, 4
    %v1212 = vperm.slane %v996, 4
    %v1213 = vmul.f32 %v1207, %v1209
    %v1214 = vmul.f32 %v1207, %v1210
    %v1215 = vmul.f32 %v1207, %v1211
    %v1216 = vmul.f32 %v1207, %v1212
    %v1217 = vadd.f32 %v1201, %v1213
    %v1218 = vadd.f32 %v1202, %v1214
    %v1219 = vadd.f32 %v1203, %v1215
    %v1220 = vadd.f32 %v1204, %v1216
    %1221 = vset.pattern.permute.xlu0 13
    %1222 = vperm.xlu0 %1221, %v1005
    %v1223 = vpop.permute.xlu0 %1222
    %v1225 = vperm.slane %v993, 5
    %v1226 = vperm.slane %v994, 5
    %v1227 = vperm.slane %v995, 5
    %v1228 = vperm.slane %v996, 5
    %v1229 = vmul.f32 %v1223, %v1225
    %v1230 = vmul.f32 %v1223, %v1226
    %v1231 = vmul.f32 %v1223, %v1227
    %v1232 = vmul.f32 %v1223, %v1228
    %v1233 = vadd.f32 %v1217, %v1229
    %v1234 = vadd.f32 %v1218, %v1230
    %v1235 = vadd.f32 %v1219, %v1231
    %v1236 = vadd.f32 %v1220, %v1232
    %1237 = vset.pattern.permute.xlu0 14
    %1238 = vperm.xlu0 %1237, %v1005
    %v1239 = vpop.permute.xlu0 %1238
    %v1241 = vperm.slane %v993, 6
    %v1242 = vperm.slane %v994, 6
    %v1243 = vperm.slane %v995, 6
    %v1244 = vperm.slane %v996, 6
    %v1245 = vmul.f32 %v1239, %v1241
    %v1246 = vmul.f32 %v1239, %v1242
    %v1247 = vmul.f32 %v1239, %v1243
    %v1248 = vmul.f32 %v1239, %v1244
    %v1249 = vadd.f32 %v1233, %v1245
    %v1250 = vadd.f32 %v1234, %v1246
    %v1251 = vadd.f32 %v1235, %v1247
    %v1252 = vadd.f32 %v1236, %v1248
    %1253 = vset.pattern.permute.xlu0 15
    %1254 = vperm.xlu0 %1253, %v1005
    %v1255 = vpop.permute.xlu0 %1254
    %v1257 = vperm.slane %v993, 7
    %v1258 = vperm.slane %v994, 7
    %v1259 = vperm.slane %v995, 7
    %v1260 = vperm.slane %v996, 7
    %v1261 = vmul.f32 %v1255, %v1257
    %v1262 = vmul.f32 %v1255, %v1258
    %v1263 = vmul.f32 %v1255, %v1259
    %v1264 = vmul.f32 %v1255, %v1260
    %v1265 = vadd.f32 %v1249, %v1261
    %v1266 = vadd.f32 %v1250, %v1262
    %v1267 = vadd.f32 %v1251, %v1263
    %v1268 = vadd.f32 %v1252, %v1264
    %1269 = vset.pattern.permute.xlu0 16
    %1270 = vperm.xlu0 %1269, %v1005
    %v1271 = vpop.permute.xlu0 %1270
    %v1273 = vperm.slane %v997, 0
    %v1274 = vperm.slane %v998, 0
    %v1275 = vperm.slane %v999, 0
    %v1276 = vperm.slane %v1000, 0
    %v1277 = vmul.f32 %v1271, %v1273
    %v1278 = vmul.f32 %v1271, %v1274
    %v1279 = vmul.f32 %v1271, %v1275
    %v1280 = vmul.f32 %v1271, %v1276
    %v1281 = vadd.f32 %v1265, %v1277
    %v1282 = vadd.f32 %v1266, %v1278
    %v1283 = vadd.f32 %v1267, %v1279
    %v1284 = vadd.f32 %v1268, %v1280
    %1285 = vset.pattern.permute.xlu0 17
    %1286 = vperm.xlu0 %1285, %v1005
    %v1287 = vpop.permute.xlu0 %1286
    %v1289 = vperm.slane %v997, 1
    %v1290 = vperm.slane %v998, 1
    %v1291 = vperm.slane %v999, 1
    %v1292 = vperm.slane %v1000, 1
    %v1293 = vmul.f32 %v1287, %v1289
    %v1294 = vmul.f32 %v1287, %v1290
    %v1295 = vmul.f32 %v1287, %v1291
    %v1296 = vmul.f32 %v1287, %v1292
    %v1297 = vadd.f32 %v1281, %v1293
    %v1298 = vadd.f32 %v1282, %v1294
    %v1299 = vadd.f32 %v1283, %v1295
    %v1300 = vadd.f32 %v1284, %v1296
    %1301 = vset.pattern.permute.xlu0 18
    %1302 = vperm.xlu0 %1301, %v1005
    %v1303 = vpop.permute.xlu0 %1302
    %v1305 = vperm.slane %v997, 2
    %v1306 = vperm.slane %v998, 2
    %v1307 = vperm.slane %v999, 2
    %v1308 = vperm.slane %v1000, 2
    %v1309 = vmul.f32 %v1303, %v1305
    %v1310 = vmul.f32 %v1303, %v1306
    %v1311 = vmul.f32 %v1303, %v1307
    %v1312 = vmul.f32 %v1303, %v1308
    %v1313 = vadd.f32 %v1297, %v1309
    %v1314 = vadd.f32 %v1298, %v1310
    %v1315 = vadd.f32 %v1299, %v1311
    %v1316 = vadd.f32 %v1300, %v1312
    %1317 = vset.pattern.permute.xlu0 19
    %1318 = vperm.xlu0 %1317, %v1005
    %v1319 = vpop.permute.xlu0 %1318
    %v1321 = vperm.slane %v997, 3
    %v1322 = vperm.slane %v998, 3
    %v1323 = vperm.slane %v999, 3
    %v1324 = vperm.slane %v1000, 3
    %v1325 = vmul.f32 %v1319, %v1321
    %v1326 = vmul.f32 %v1319, %v1322
    %v1327 = vmul.f32 %v1319, %v1323
    %v1328 = vmul.f32 %v1319, %v1324
    %v1329 = vadd.f32 %v1313, %v1325
    %v1330 = vadd.f32 %v1314, %v1326
    %v1331 = vadd.f32 %v1315, %v1327
    %v1332 = vadd.f32 %v1316, %v1328
    %1333 = vset.pattern.permute.xlu0 20
    %1334 = vperm.xlu0 %1333, %v1005
    %v1335 = vpop.permute.xlu0 %1334
    %v1337 = vperm.slane %v997, 4
    %v1338 = vperm.slane %v998, 4
    %v1339 = vperm.slane %v999, 4
    %v1340 = vperm.slane %v1000, 4
    %v1341 = vmul.f32 %v1335, %v1337
    %v1342 = vmul.f32 %v1335, %v1338
    %v1343 = vmul.f32 %v1335, %v1339
    %v1344 = vmul.f32 %v1335, %v1340
    %v1345 = vadd.f32 %v1329, %v1341
    %v1346 = vadd.f32 %v1330, %v1342
    %v1347 = vadd.f32 %v1331, %v1343
    %v1348 = vadd.f32 %v1332, %v1344
    %1349 = vset.pattern.permute.xlu0 21
    %1350 = vperm.xlu0 %1349, %v1005
    %v1351 = vpop.permute.xlu0 %1350
    %v1353 = vperm.slane %v997, 5
    %v1354 = vperm.slane %v998, 5
    %v1355 = vperm.slane %v999, 5
    %v1356 = vperm.slane %v1000, 5
    %v1357 = vmul.f32 %v1351, %v1353
    %v1358 = vmul.f32 %v1351, %v1354
    %v1359 = vmul.f32 %v1351, %v1355
    %v1360 = vmul.f32 %v1351, %v1356
    %v1361 = vadd.f32 %v1345, %v1357
    %v1362 = vadd.f32 %v1346, %v1358
    %v1363 = vadd.f32 %v1347, %v1359
    %v1364 = vadd.f32 %v1348, %v1360
    %1365 = vset.pattern.permute.xlu0 22
    %1366 = vperm.xlu0 %1365, %v1005
    %v1367 = vpop.permute.xlu0 %1366
    %v1369 = vperm.slane %v997, 6
    %v1370 = vperm.slane %v998, 6
    %v1371 = vperm.slane %v999, 6
    %v1372 = vperm.slane %v1000, 6
    %v1373 = vmul.f32 %v1367, %v1369
    %v1374 = vmul.f32 %v1367, %v1370
    %v1375 = vmul.f32 %v1367, %v1371
    %v1376 = vmul.f32 %v1367, %v1372
    %v1377 = vadd.f32 %v1361, %v1373
    %v1378 = vadd.f32 %v1362, %v1374
    %v1379 = vadd.f32 %v1363, %v1375
    %v1380 = vadd.f32 %v1364, %v1376
    %1381 = vset.pattern.permute.xlu0 23
    %1382 = vperm.xlu0 %1381, %v1005
    %v1383 = vpop.permute.xlu0 %1382
    %v1385 = vperm.slane %v997, 7
    %v1386 = vperm.slane %v998, 7
    %v1387 = vperm.slane %v999, 7
    %v1388 = vperm.slane %v1000, 7
    %v1389 = vmul.f32 %v1383, %v1385
    %v1390 = vmul.f32 %v1383, %v1386
    %v1391 = vmul.f32 %v1383, %v1387
    %v1392 = vmul.f32 %v1383, %v1388
    %v1393 = vadd.f32 %v1377, %v1389
    %v1394 = vadd.f32 %v1378, %v1390
    %v1395 = vadd.f32 %v1379, %v1391
    %v1396 = vadd.f32 %v1380, %v1392
    %1397 = vset.pattern.permute.xlu0 24
    %1398 = vperm.xlu0 %1397, %v1005
    %v1399 = vpop.permute.xlu0 %1398
    %v1401 = vperm.slane %v1001, 0
    %v1402 = vperm.slane %v1002, 0
    %v1403 = vperm.slane %v1003, 0
    %v1404 = vperm.slane %v1004, 0
    %v1405 = vmul.f32 %v1399, %v1401
    %v1406 = vmul.f32 %v1399, %v1402
    %v1407 = vmul.f32 %v1399, %v1403
    %v1408 = vmul.f32 %v1399, %v1404
    %v1409 = vadd.f32 %v1393, %v1405
    %v1410 = vadd.f32 %v1394, %v1406
    %v1411 = vadd.f32 %v1395, %v1407
    %v1412 = vadd.f32 %v1396, %v1408
    %1413 = vset.pattern.permute.xlu0 25
    %1414 = vperm.xlu0 %1413, %v1005
    %v1415 = vpop.permute.xlu0 %1414
    %v1417 = vperm.slane %v1001, 1
    %v1418 = vperm.slane %v1002, 1
    %v1419 = vperm.slane %v1003, 1
    %v1420 = vperm.slane %v1004, 1
    %v1421 = vmul.f32 %v1415, %v1417
    %v1422 = vmul.f32 %v1415, %v1418
    %v1423 = vmul.f32 %v1415, %v1419
    %v1424 = vmul.f32 %v1415, %v1420
    %v1425 = vadd.f32 %v1409, %v1421
    %v1426 = vadd.f32 %v1410, %v1422
    %v1427 = vadd.f32 %v1411, %v1423
    %v1428 = vadd.f32 %v1412, %v1424
    %1429 = vset.pattern.permute.xlu0 26
    %1430 = vperm.xlu0 %1429, %v1005
    %v1431 = vpop.permute.xlu0 %1430
    %v1433 = vperm.slane %v1001, 2
    %v1434 = vperm.slane %v1002, 2
    %v1435 = vperm.slane %v1003, 2
    %v1436 = vperm.slane %v1004, 2
    %v1437 = vmul.f32 %v1431, %v1433
    %v1438 = vmul.f32 %v1431, %v1434
    %v1439 = vmul.f32 %v1431, %v1435
    %v1440 = vmul.f32 %v1431, %v1436
    %v1441 = vadd.f32 %v1425, %v1437
    %v1442 = vadd.f32 %v1426, %v1438
    %v1443 = vadd.f32 %v1427, %v1439
    %v1444 = vadd.f32 %v1428, %v1440
    %1445 = vset.pattern.permute.xlu0 27
    %1446 = vperm.xlu0 %1445, %v1005
    %v1447 = vpop.permute.xlu0 %1446
    %v1449 = vperm.slane %v1001, 3
    %v1450 = vperm.slane %v1002, 3
    %v1451 = vperm.slane %v1003, 3
    %v1452 = vperm.slane %v1004, 3
    %v1453 = vmul.f32 %v1447, %v1449
    %v1454 = vmul.f32 %v1447, %v1450
    %v1455 = vmul.f32 %v1447, %v1451
    %v1456 = vmul.f32 %v1447, %v1452
    %v1457 = vadd.f32 %v1441, %v1453
    %v1458 = vadd.f32 %v1442, %v1454
    %v1459 = vadd.f32 %v1443, %v1455
    %v1460 = vadd.f32 %v1444, %v1456
    %1461 = vset.pattern.permute.xlu0 28
    %1462 = vperm.xlu0 %1461, %v1005
    %v1463 = vpop.permute.xlu0 %1462
    %v1465 = vperm.slane %v1001, 4
    %v1466 = vperm.slane %v1002, 4
    %v1467 = vperm.slane %v1003, 4
    %v1468 = vperm.slane %v1004, 4
    %v1469 = vmul.f32 %v1463, %v1465
    %v1470 = vmul.f32 %v1463, %v1466
    %v1471 = vmul.f32 %v1463, %v1467
    %v1472 = vmul.f32 %v1463, %v1468
    %v1473 = vadd.f32 %v1457, %v1469
    %v1474 = vadd.f32 %v1458, %v1470
    %v1475 = vadd.f32 %v1459, %v1471
    %v1476 = vadd.f32 %v1460, %v1472
    %1477 = vset.pattern.permute.xlu0 29
    %1478 = vperm.xlu0 %1477, %v1005
    %v1479 = vpop.permute.xlu0 %1478
    %v1481 = vperm.slane %v1001, 5
    %v1482 = vperm.slane %v1002, 5
    %v1483 = vperm.slane %v1003, 5
    %v1484 = vperm.slane %v1004, 5
    %v1485 = vmul.f32 %v1479, %v1481
    %v1486 = vmul.f32 %v1479, %v1482
    %v1487 = vmul.f32 %v1479, %v1483
    %v1488 = vmul.f32 %v1479, %v1484
    %v1489 = vadd.f32 %v1473, %v1485
    %v1490 = vadd.f32 %v1474, %v1486
    %v1491 = vadd.f32 %v1475, %v1487
    %v1492 = vadd.f32 %v1476, %v1488
    %1493 = vset.pattern.permute.xlu0 30
    %1494 = vperm.xlu0 %1493, %v1005
    %v1495 = vpop.permute.xlu0 %1494
    %v1497 = vperm.slane %v1001, 6
    %v1498 = vperm.slane %v1002, 6
    %v1499 = vperm.slane %v1003, 6
    %v1500 = vperm.slane %v1004, 6
    %v1501 = vmul.f32 %v1495, %v1497
    %v1502 = vmul.f32 %v1495, %v1498
    %v1503 = vmul.f32 %v1495, %v1499
    %v1504 = vmul.f32 %v1495, %v1500
    %v1505 = vadd.f32 %v1489, %v1501
    %v1506 = vadd.f32 %v1490, %v1502
    %v1507 = vadd.f32 %v1491, %v1503
    %v1508 = vadd.f32 %v1492, %v1504
    %1509 = vset.pattern.permute.xlu0 31
    %1510 = vperm.xlu0 %1509, %v1005
    %v1511 = vpop.permute.xlu0 %1510
    %v1513 = vperm.slane %v1001, 7
    %v1514 = vperm.slane %v1002, 7
    %v1515 = vperm.slane %v1003, 7
    %v1516 = vperm.slane %v1004, 7
    %v1517 = vmul.f32 %v1511, %v1513
    %v1518 = vmul.f32 %v1511, %v1514
    %v1519 = vmul.f32 %v1511, %v1515
    %v1520 = vmul.f32 %v1511, %v1516
    %v1521 = vadd.f32 %v1505, %v1517
    %v1522 = vadd.f32 %v1506, %v1518
    %v1523 = vadd.f32 %v1507, %v1519
    %v1524 = vadd.f32 %v1508, %v1520
    %v1529 = vrot.slane %v1522, 6
    %v1530 = vrot.slane %v1523, 4
    %v1531 = vrot.slane %v1524, 2
    %vm1532 = vcmask 1041408
    %v1533 = vsel %vm1532, %v1521, %v1529
    %vm1534 = vcmask 1045508
    %v1535 = vsel %vm1534, %v1530, %v1531
    %vm1536 = vcmask 1043456
    %v1537 = vsel %vm1536, %v1533, %v1535
    %1539 = vst [vmem:[#allocation2] sm:$0xff] %v1537
    // Predicated region
    $region30: #{generator_forward.1} parent=1 // pred_check
      _
    $region31: #{generator_forward.1} parent=1 // pred_check_branch
      %1541 = sbr.rel (0) target = $region33
    $region32: #{generator_forward.1} parent=1 // pred_region
      %1543 = vsyncadd [#allocation3], 96
      %s1545 = sshll.u32 [#allocation2], 4
      %s1546 = int_to_ptr.vmem [resolvable:$true] %s1545
      %s1547 = sshll.u32 %s7, 4
      %s1548 = int_to_ptr.hbm [resolvable:$true] %s1547
      %1550 = dma.vmem_to_hbm [thread:$0]  %s1546, 32, %s1548, [#allocation3]
    $region33: #{generator_forward.1} parent=1 // pred_fallthru
      _
    // Predicated region
    $region34: #{generator_forward.1} parent=1 // pred_check
      _
    $region35: #{generator_forward.1} parent=1 // pred_check_branch
      %1552 = sbr.rel (0) target = $region37
    $region36: #{generator_forward.1} parent=1 // pred_region
      %1554 = dma.done [#allocation3], 128
    $region37: #{generator_forward.1} parent=1 // pred_fallthru
      _
    %1555 = vsyncpa [#allocation3], 1

</llo_original>
